<compile_context>
chip_gen: v5e
topology: v5e:2x2
jax: 0.10.0
libtpu: 0.0.40
codegen_flags: <defaults>
</compile_context>

<pallas_src>
import jax
import jax.numpy as jnp
from jax.experimental import pallas as pl
from jax.experimental.pallas import tpu as pltpu

NEG_SLOPE = 0.01   # torch.nn.functional.leaky_relu default
LANE = 128


def _round_up(x, m):
    return ((x + m - 1) // m) * m


def _leaky_relu(x):
    return jnp.where(x >= 0, x, NEG_SLOPE * x)


# ---------------------------------------------------------------------------
# Generation-aware configuration
# ---------------------------------------------------------------------------
def _tpu_config():
    """Return (row_tile, vmem_limit_bytes) for the local TPU generation."""
    vmem_bytes = 64 << 20                       # conservative default (v7x)
    try:
        info = pltpu.get_tpu_info()
        vmem_bytes = int(getattr(info, "vmem_capacity_bytes", vmem_bytes))
    except Exception:
        pass
    if vmem_bytes >= (100 << 20):               # v5e / v6e: 128 MiB physical
        return 512, 96 << 20
    return 256, 44 << 20                        # v7x: 64 MiB physical


def _pick_row_tile(n, row_tile):
    if n >= 2 * row_tile:
        return row_tile
    # Small graph: two row tiles (keeps the parallel axis >= 2 steps when
    # possible); multiple of 32 so int8 / bf16 sublane tiling is always legal.
    return max(32, _round_up(-(-n // 2), 32))


def _pick_pre_tile(tm, n_pad, fin_pad, hp, vmem_limit):
    """Shrink the pre-pass row tile if a huge input feature dim would blow VMEM."""
    budget = int(vmem_limit * 0.6)

    def est(t):
        return (2 * t * fin_pad * 4          # x tile (f32, double buffered)
                + 2 * fin_pad * hp * 4       # Wp resident (double buffered)
                + 4 * hp * hp * 4            # Wl + W_init
                + 4 * t * hp * 2)            # h1 + t outputs (bf16)

    tm_pre = tm
    while (tm_pre > 32 and est(tm_pre) > budget
           and (tm_pre // 2) % 32 == 0 and n_pad % (tm_pre // 2) == 0):
        tm_pre //= 2
    return tm_pre


def _pick_tk(n_pad, tm, hp, vmem_limit):
    """Source-block size for the prop pass.

    Prefer a single K step (tk == n_pad): t is then fetched from HBM exactly
    once per cell and stays VMEM-resident.  Only fall back to K-tiling (which
    re-streams t once per row slab) when the full-width A slab + resident t
    would not fit the VMEM budget (very large graphs, mostly a v7x concern).
    """
    budget = int(vmem_limit * 0.6)

    def est(tk):
        return (2 * tm * tk                  # int8 A slab (double buffered)
                + 2 * tk * hp * 2            # t block (bf16, double buffered)
                + 2 * tm * hp * 2            # h1 row tile
                + 2 * tm * max(hp, LANE) * 4 # output tile
                + tm * hp * 4                # f32 accumulator scratch
                + 4 * hp * hp * 4)           # W_root (+ classifier), small

    if est(n_pad) <= budget:
        return n_pad
    cands = [d for d in range(LANE, n_pad, LANE)
             if n_pad % d == 0 and est(d) <= budget]
    return max(cands) if cands else n_pad


# ---------------------------------------------------------------------------
# Kernels
# ---------------------------------------------------------------------------
def _cell_pre_kernel(x_ref, wp_ref, bp_ref, wl_ref, bl_ref, wi_ref,
                     h1_ref, t_ref):
    """Per node-row tile: preprocessor + linear + ARMA init GEMM."""
    x = x_ref[...]
    h = jnp.dot(x, wp_ref[...], preferred_element_type=jnp.float32) + bp_ref[...]
    h1 = _leaky_relu(
        jnp.dot(h, wl_ref[...], preferred_element_type=jnp.float32) + bl_ref[...])
    t = jnp.dot(h1, wi_ref[...], preferred_element_type=jnp.float32)
    # bf16 outputs halve the HBM round-trip; r is recomputed in the prop pass.
    h1_ref[...] = h1.astype(jnp.bfloat16)
    t_ref[...] = t.astype(jnp.bfloat16)


def _arma_epilogue(acc, scale, h1_ref, wr_ref, ba_ref):
    """agg = scale*acc ; r = h1@W_root+b ; h2 = relu(agg+r) ; tanh(h1+h2)."""
    agg = acc * scale
    h1 = h1_ref[...].astype(jnp.float32)
    r = jnp.dot(h1, wr_ref[...], preferred_element_type=jnp.float32) + ba_ref[...]
    # ARMAConv's internal act is ReLU; the cell's extra leaky_relu is the
    # identity on a non-negative input, so a single relu is exact.
    h2 = jnp.maximum(agg + r, 0.0)
    return jnp.tanh(h1 + h2)


def _accumulate(aq_ref, t_ref, acc_ref):
    k = pl.program_id(1)

    @pl.when(k == 0)
    def _():
        acc_ref[...] = jnp.zeros_like(acc_ref)

    # int8 A block dequantized to bf16 in-kernel (exact: |q| <= 127), bf16 MXU,
    # f32 accumulation; the per-row scale is applied once in the epilogue.
    acc_ref[...] += jnp.dot(aq_ref[...].astype(jnp.bfloat16), t_ref[...],
                            preferred_element_type=jnp.float32)


def _cell_prop_kernel(aq_ref, t_ref, scale_ref, h1_ref, wr_ref, ba_ref,
                      out_ref, acc_ref):
    _accumulate(aq_ref, t_ref, acc_ref)

    @pl.when(pl.program_id(1) == pl.num_programs(1) - 1)
    def _():
        out_ref[...] = _arma_epilogue(acc_ref[...], scale_ref[...],
                                      h1_ref, wr_ref, ba_ref)


def _cell_prop_cls_kernel(aq_ref, t_ref, scale_ref, h1_ref, wr_ref, ba_ref,
                          wc_ref, bc_ref, out_ref, acc_ref):
    _accumulate(aq_ref, t_ref, acc_ref)

    @pl.when(pl.program_id(1) == pl.num_programs(1) - 1)
    def _():
        y = _arma_epilogue(acc_ref[...], scale_ref[...], h1_ref, wr_ref, ba_ref)
        # Lane-dense (128-wide) classifier; padded lanes carry bias = -1e30 so
        # they contribute exp() = 0 and do not perturb the real log_softmax.
        logits = (jnp.dot(y, wc_ref[...], preferred_element_type=jnp.float32)
                  + bc_ref[...])
        m = jnp.max(logits, axis=-1, keepdims=True)
        z = logits - m
        lse = jnp.log(jnp.sum(jnp.exp(z), axis=-1, keepdims=True))
        out_ref[...] = z - lse


# ---------------------------------------------------------------------------
# pallas_call wrappers
# ---------------------------------------------------------------------------
def _cell_pre(x, cell, tm_pre, vmem_limit):
    n_pad, fin_pad = x.shape
    hp = cell["wl"].shape[1]
    return pl.pallas_call(
        _cell_pre_kernel,
        out_shape=(jax.ShapeDtypeStruct((n_pad, hp), jnp.bfloat16),
                   jax.ShapeDtypeStruct((n_pad, hp), jnp.bfloat16)),
        grid=(n_pad // tm_pre,),
        in_specs=[
            pl.BlockSpec((tm_pre, fin_pad), lambda i: (i, 0)),
            pl.BlockSpec(cell["wp"].shape, lambda i: (0, 0)),
            pl.BlockSpec(cell["bp"].shape, lambda i: (0, 0)),
            pl.BlockSpec(cell["wl"].shape, lambda i: (0, 0)),
            pl.BlockSpec(cell["bl"].shape, lambda i: (0, 0)),
            pl.BlockSpec(cell["wi"].shape, lambda i: (0, 0)),
        ],
        out_specs=(pl.BlockSpec((tm_pre, hp), lambda i: (i, 0)),
                   pl.BlockSpec((tm_pre, hp), lambda i: (i, 0))),
        compiler_params=pltpu.CompilerParams(
            dimension_semantics=("parallel",),
            vmem_limit_bytes=vmem_limit),
    )(x, cell["wp"], cell["bp"], cell["wl"], cell["bl"], cell["wi"])


def _cell_prop(aq, a_scale, t, h1, cell, tm, tk, vmem_limit, wc=None, bc=None):
    n_pad = aq.shape[0]
    hp = t.shape[1]
    kb = n_pad // tk

    in_specs = [
        pl.BlockSpec((tm, tk), lambda i, k: (i, k)),      # int8 A slab (streamed)
        pl.BlockSpec((tk, hp), lambda i, k: (k, 0)),      # t source block
        pl.BlockSpec((tm, 1), lambda i, k: (i, 0)),       # per-row dequant scale
        pl.BlockSpec((tm, hp), lambda i, k: (i, 0)),      # h1 row tile (bf16)
        pl.BlockSpec(cell["wr"].shape, lambda i, k: (0, 0)),
        pl.BlockSpec(cell["ba"].shape, lambda i, k: (0, 0)),
    ]
    args = [aq, t, a_scale, h1, cell["wr"], cell["ba"]]
    if wc is None:
        kernel = _cell_prop_kernel
        out_cols = hp
    else:
        kernel = _cell_prop_cls_kernel
        out_cols = wc.shape[1]
        in_specs += [pl.BlockSpec(wc.shape, lambda i, k: (0, 0)),
                     pl.BlockSpec(bc.shape, lambda i, k: (0, 0))]
        args += [wc, bc]

    return pl.pallas_call(
        kernel,
        out_shape=jax.ShapeDtypeStruct((n_pad, out_cols), jnp.float32),
        grid=(n_pad // tm, kb),
        in_specs=in_specs,
        out_specs=pl.BlockSpec((tm, out_cols), lambda i, k: (i, 0)),
        scratch_shapes=[pltpu.VMEM((tm, hp), jnp.float32)],
        compiler_params=pltpu.CompilerParams(
            dimension_semantics=("parallel", "arbitrary"),
            vmem_limit_bytes=vmem_limit),
    )(*args)


# ---------------------------------------------------------------------------
# Graph normalization + quantization, parameters (plain JAX glue)
# ---------------------------------------------------------------------------
def gcn_norm_dense_int8(edge_index, edge_weight, num_nodes, padded_nodes):
    """Dense GCN normalization (add_self_loops=False), A[target, source],
    symmetric per-row int8 quantization with an f32 scale column."""
    row = edge_index[0]          # source nodes
    col = edge_index[1]          # target nodes
    w = edge_weight.astype(jnp.float32)
    deg = jnp.zeros((num_nodes,), jnp.float32).at[col].add(w)
    dinv = jnp.where(deg > 0, jax.lax.rsqrt(deg), 0.0)
    norm = dinv[row] * w * dinv[col]
    a = jnp.zeros((padded_nodes, padded_nodes), jnp.float32).at[col, row].add(norm)
    amax = jnp.max(jnp.abs(a), axis=1, keepdims=True)
    scale = jnp.where(amax > 0.0, amax / 127.0, 1.0)
    aq = jnp.round(a / scale).astype(jnp.int8)
    return aq, scale


def init_params(key, features_num, num_class, num_layers=2, hidden=64):
    """Logical (un-padded, torch-layout) parameters for NasPhy10000."""
    hidden_dim = max(hidden, num_class * 2)
    cur_dim = features_num
    params = {"cells": []}
    for _ in range(num_layers):
        key, *ks = jax.random.split(key, 8)
        cell = dict(
            wp=0.1 * jax.random.normal(ks[0], (cur_dim, hidden_dim), jnp.float32),
            bp=0.1 * jax.random.normal(ks[1], (1, hidden_dim), jnp.float32),
            wl=0.1 * jax.random.normal(ks[2], (hidden_dim, hidden_dim), jnp.float32),
            bl=0.1 * jax.random.normal(ks[3], (1, hidden_dim), jnp.float32),
            wi=0.1 * jax.random.normal(ks[4], (hidden_dim, hidden_dim), jnp.float32),
            wr=0.1 * jax.random.normal(ks[5], (hidden_dim, hidden_dim), jnp.float32),
            ba=0.1 * jax.random.normal(ks[6], (1, hidden_dim), jnp.float32),
        )
        params["cells"].append(cell)
        cur_dim = hidden_dim
    key, k1, k2 = jax.random.split(key, 3)
    params["wc"] = 0.1 * jax.random.normal(k1, (cur_dim, num_class), jnp.float32)
    params["bc"] = 0.1 * jax.random.normal(k2, (1, num_class), jnp.float32)
    return params


def _pad2(x, rows, cols):
    return jnp.pad(x, ((0, rows - x.shape[0]), (0, cols - x.shape[1])))


def prepare_params(params, features_num):
    """Zero-pad hidden dims (and the classifier) to multiples of 128.

    Zero padding is exact: padded lanes stay exactly zero through every linear
    layer (padded weight cols + zero bias), leaky_relu(0)=relu(0)=tanh(0)=0.
    Classifier padded lanes get bias -1e30 so they vanish in the log_softmax.
    """
    prepared = {"cells": []}
    in_dim = _round_up(features_num, LANE)
    for cell in params["cells"]:
        h = cell["wp"].shape[1]
        hp = _round_up(h, LANE)
        prepared["cells"].append(dict(
            wp=_pad2(cell["wp"], in_dim, hp),
            bp=_pad2(cell["bp"], 1, hp),
            wl=_pad2(cell["wl"], hp, hp),
            bl=_pad2(cell["bl"], 1, hp),
            wi=_pad2(cell["wi"], hp, hp),
            wr=_pad2(cell["wr"], hp, hp),
            ba=_pad2(cell["ba"], 1, hp),
        ))
        in_dim = hp
    nc = params["wc"].shape[1]
    cpad = _round_up(nc, LANE)
    prepared["wc"] = _pad2(params["wc"], in_dim, cpad)
    prepared["bc"] = jnp.full((1, cpad), -1e30, jnp.float32).at[:, :nc].set(
        params["bc"][0])
    return prepared


# ---------------------------------------------------------------------------
# Forward
# ---------------------------------------------------------------------------
def nas_phy10000_forward(params, x, edge_index, edge_weight, num_class):
    n, fin = x.shape
    fin_pad = _round_up(fin, LANE)
    row_tile, vmem_limit = _tpu_config()
    tm = _pick_row_tile(n, row_tile)
    n_pad = _round_up(n, tm)

    # Dense GCN-normalized adjacency, int8 + per-row scale (plain-JAX glue).
    aq, a_scale = gcn_norm_dense_int8(edge_index, edge_weight, n, n_pad)

    # F.dropout(x, p=0.5, training=False) is identity in eval mode.
    h = jnp.pad(x.astype(jnp.float32), ((0, n_pad - n), (0, fin_pad - fin)))

    cells = params["cells"]
    out = None
    for li, cell in enumerate(cells):
        hp = cell["wl"].shape[1]
        tk = _pick_tk(n_pad, tm, hp, vmem_limit)
        tm_pre = _pick_pre_tile(tm, n_pad, h.shape[1], hp, vmem_limit)
        h1, t = _cell_pre(h, cell, tm_pre, vmem_limit)
        if li == len(cells) - 1:
            out = _cell_prop(aq, a_scale, t, h1, cell, tm, tk, vmem_limit,
                             wc=params["wc"], bc=params["bc"])
        else:
            h = _cell_prop(aq, a_scale, t, h1, cell, tm, tk, vmem_limit)
    return out[:n, :num_class]


# ---------------------------------------------------------------------------
# Pure-JAX f32 reference (mirrors the PyTorch module)
# ---------------------------------------------------------------------------
def reference_forward(params, x, edge_index, edge_weight):
    n = x.shape[0]
    row, col = edge_index[0], edge_index[1]
    w = edge_weight.astype(jnp.float32)
    deg = jnp.zeros((n,), jnp.float32).at[col].add(w)
    dinv = jnp.where(deg > 0, jax.lax.rsqrt(deg), 0.0)
    norm = dinv[row] * w * dinv[col]
    a = jnp.zeros((n, n), jnp.float32).at[col, row].add(norm)
    h = x.astype(jnp.float32)
    for cell in params["cells"]:
        hh = h @ cell["wp"] + cell["bp"]
        h1 = _leaky_relu(hh @ cell["wl"] + cell["bl"])
        agg = a @ (h1 @ cell["wi"])
        h2 = _leaky_relu(jnp.maximum(agg + h1 @ cell["wr"] + cell["ba"], 0.0))
        h = jnp.tanh(h1 + h2)
    logits = h @ params["wc"] + params["bc"]
    return jax.nn.log_softmax(logits, axis=-1)


if __name__ == "__main__":
    # Small synthetic graph: 64 nodes, 16 features, 4 classes, hidden=32, 128 edges.
    N, FEATURES, NUM_CLASS, HIDDEN, E = 64, 16, 4, 32, 128

    key = jax.random.PRNGKey(0)
    key, kx, ke, kw = jax.random.split(key, 4)
    x = jax.random.normal(kx, (N, FEATURES), jnp.float32)
    edge_index = jax.random.randint(ke, (2, E), 0, N, dtype=jnp.int32)
    edge_weight = jax.random.uniform(kw, (E,), jnp.float32, 0.1, 1.0)

    raw_params = init_params(key, FEATURES, NUM_CLASS, num_layers=2, hidden=HIDDEN)
    params = prepare_params(raw_params, FEATURES)

    fwd = jax.jit(nas_phy10000_forward, static_argnames=("num_class",))
    out = jax.block_until_ready(
        fwd(params, x, edge_index, edge_weight, num_class=NUM_CLASS))

    assert out.shape == (N, NUM_CLASS)
    assert bool(jnp.all(jnp.isfinite(out)))
    # log_softmax rows should (approximately) exponentiate-sum to 1
    assert bool(jnp.allclose(jnp.sum(jnp.exp(out), axis=-1), 1.0, atol=1e-3))

    # Compare against a pure-JAX f32 reference; the only deviations are the
    # int8 adjacency and bf16 h1/t intermediates (loose tolerance).
    ref = reference_forward(raw_params, x, edge_index, edge_weight)
    err = float(jnp.max(jnp.abs(out - ref)))
    assert err < 0.2, f"max |pallas - reference| = {err}"

    print("KERNEL_OK")
</pallas_src>

<mosaic_0001>
module attributes {stable_mosaic.version = 11 : i64} {
  func.func @_cell_pre_kernel(%arg0: i32, %arg1: memref<32x128xf32, #tpu.memory_space<vmem>>, %arg2: memref<128x128xf32, #tpu.memory_space<vmem>>, %arg3: memref<1x128xf32, #tpu.memory_space<vmem>>, %arg4: memref<128x128xf32, #tpu.memory_space<vmem>>, %arg5: memref<1x128xf32, #tpu.memory_space<vmem>>, %arg6: memref<128x128xf32, #tpu.memory_space<vmem>>, %arg7: memref<32x128xbf16, #tpu.memory_space<vmem>>, %arg8: memref<32x128xbf16, #tpu.memory_space<vmem>>) attributes {dimension_semantics = [#tpu.dimension_semantics<parallel>], iteration_bounds = array<i64: 2>, scalar_prefetch = 0 : i64, scratch_operands = 0 : i64, tpu.core_type = #tpu.core_type<tc>, window_params = [{transform_indices = @transform_0, window_bounds = array<i64: 32, 128>}, {pipeline_mode = #tpu.pipeline_mode<synchronous>, transform_indices = @transform_1, window_bounds = array<i64: 128, 128>}, {pipeline_mode = #tpu.pipeline_mode<synchronous>, transform_indices = @transform_2, window_bounds = array<i64: 1, 128>}, {pipeline_mode = #tpu.pipeline_mode<synchronous>, transform_indices = @transform_3, window_bounds = array<i64: 128, 128>}, {pipeline_mode = #tpu.pipeline_mode<synchronous>, transform_indices = @transform_4, window_bounds = array<i64: 1, 128>}, {pipeline_mode = #tpu.pipeline_mode<synchronous>, transform_indices = @transform_5, window_bounds = array<i64: 128, 128>}, {transform_indices = @transform_6, window_bounds = array<i64: 32, 128>}, {transform_indices = @transform_7, window_bounds = array<i64: 32, 128>}]} {
    %c0 = arith.constant 0 : index
    %c0_0 = arith.constant 0 : index
    %0 = vector.load %arg1[%c0, %c0_0] : memref<32x128xf32, #tpu.memory_space<vmem>>, vector<32x128xf32>
    %c0_1 = arith.constant 0 : index
    %c0_2 = arith.constant 0 : index
    %1 = vector.load %arg2[%c0_1, %c0_2] : memref<128x128xf32, #tpu.memory_space<vmem>>, vector<128x128xf32>
    %cst = arith.constant dense<0.000000e+00> : vector<32x128xf32>
    %2 = tpu.matmul %0, %1, %cst {dimension_numbers = #tpu.dot_dimension_numbers<[1], [0], [0], [1], [0, 0, 1, 1], [], []>} : vector<32x128xf32>, vector<128x128xf32>, vector<32x128xf32> -> vector<32x128xf32>
    %c0_3 = arith.constant 0 : index
    %c0_4 = arith.constant 0 : index
    %3 = vector.load %arg3[%c0_3, %c0_4] : memref<1x128xf32, #tpu.memory_space<vmem>>, vector<1x128xf32>
    %4 = vector.broadcast %3 : vector<1x128xf32> to vector<32x128xf32>
    %5 = arith.addf %2, %4 : vector<32x128xf32>
    %c0_5 = arith.constant 0 : index
    %c0_6 = arith.constant 0 : index
    %6 = vector.load %arg4[%c0_5, %c0_6] : memref<128x128xf32, #tpu.memory_space<vmem>>, vector<128x128xf32>
    %cst_7 = arith.constant dense<0.000000e+00> : vector<32x128xf32>
    %7 = tpu.matmul %5, %6, %cst_7 {dimension_numbers = #tpu.dot_dimension_numbers<[1], [0], [0], [1], [0, 0, 1, 1], [], []>} : vector<32x128xf32>, vector<128x128xf32>, vector<32x128xf32> -> vector<32x128xf32>
    %c0_8 = arith.constant 0 : index
    %c0_9 = arith.constant 0 : index
    %8 = vector.load %arg5[%c0_8, %c0_9] : memref<1x128xf32, #tpu.memory_space<vmem>>, vector<1x128xf32>
    %9 = vector.broadcast %8 : vector<1x128xf32> to vector<32x128xf32>
    %10 = arith.addf %7, %9 : vector<32x128xf32>
    %cst_10 = arith.constant 0.000000e+00 : f32
    %11 = vector.broadcast %cst_10 : f32 to vector<32x128xf32>
    %12 = arith.cmpf oge, %10, %11 : vector<32x128xf32>
    %cst_11 = arith.constant 0.00999999977 : f32
    %13 = vector.broadcast %cst_11 : f32 to vector<32x128xf32>
    %14 = arith.mulf %13, %10 : vector<32x128xf32>
    %15 = arith.select %12, %10, %14 : vector<32x128xi1>, vector<32x128xf32>
    %c0_12 = arith.constant 0 : index
    %c0_13 = arith.constant 0 : index
    %16 = vector.load %arg6[%c0_12, %c0_13] : memref<128x128xf32, #tpu.memory_space<vmem>>, vector<128x128xf32>
    %cst_14 = arith.constant dense<0.000000e+00> : vector<32x128xf32>
    %17 = tpu.matmul %15, %16, %cst_14 {dimension_numbers = #tpu.dot_dimension_numbers<[1], [0], [0], [1], [0, 0, 1, 1], [], []>} : vector<32x128xf32>, vector<128x128xf32>, vector<32x128xf32> -> vector<32x128xf32>
    %18 = arith.truncf %15 : vector<32x128xf32> to vector<32x128xbf16>
    %c0_15 = arith.constant 0 : index
    %c0_16 = arith.constant 0 : index
    %19 = vector.load %arg7[%c0_15, %c0_16] : memref<32x128xbf16, #tpu.memory_space<vmem>>, vector<32x128xbf16>
    tpu.vector_store %arg7[%c0_15, %c0_16], %18 {strides = array<i32>} : memref<32x128xbf16, #tpu.memory_space<vmem>>, vector<32x128xbf16>,
    %20 = arith.truncf %17 : vector<32x128xf32> to vector<32x128xbf16>
    %c0_17 = arith.constant 0 : index
    %c0_18 = arith.constant 0 : index
    %21 = vector.load %arg8[%c0_17, %c0_18] : memref<32x128xbf16, #tpu.memory_space<vmem>>, vector<32x128xbf16>
    tpu.vector_store %arg8[%c0_17, %c0_18], %20 {strides = array<i32>} : memref<32x128xbf16, #tpu.memory_space<vmem>>, vector<32x128xbf16>,
    return
  }
  func.func @transform_0(%arg0: i32) -> (i32, i32) {
    %c0_i32 = arith.constant 0 : i32
    %c0_i32_0 = arith.constant 0 : i32
    return %arg0, %c0_i32 : i32, i32
  }
  func.func @transform_1(%arg0: i32) -> (i32, i32) {
    %c0_i32 = arith.constant 0 : i32
    %c0_i32_0 = arith.constant 0 : i32
    %c0_i32_1 = arith.constant 0 : i32
    return %c0_i32, %c0_i32_0 : i32, i32
  }
  func.func @transform_2(%arg0: i32) -> (i32, i32) {
    %c0_i32 = arith.constant 0 : i32
    %c0_i32_0 = arith.constant 0 : i32
    %c0_i32_1 = arith.constant 0 : i32
    return %c0_i32, %c0_i32_0 : i32, i32
  }
  func.func @transform_3(%arg0: i32) -> (i32, i32) {
    %c0_i32 = arith.constant 0 : i32
    %c0_i32_0 = arith.constant 0 : i32
    %c0_i32_1 = arith.constant 0 : i32
    return %c0_i32, %c0_i32_0 : i32, i32
  }
  func.func @transform_4(%arg0: i32) -> (i32, i32) {
    %c0_i32 = arith.constant 0 : i32
    %c0_i32_0 = arith.constant 0 : i32
    %c0_i32_1 = arith.constant 0 : i32
    return %c0_i32, %c0_i32_0 : i32, i32
  }
  func.func @transform_5(%arg0: i32) -> (i32, i32) {
    %c0_i32 = arith.constant 0 : i32
    %c0_i32_0 = arith.constant 0 : i32
    %c0_i32_1 = arith.constant 0 : i32
    return %c0_i32, %c0_i32_0 : i32, i32
  }
  func.func @transform_6(%arg0: i32) -> (i32, i32) {
    %c0_i32 = arith.constant 0 : i32
    %c0_i32_0 = arith.constant 0 : i32
    return %arg0, %c0_i32 : i32, i32
  }
  func.func @transform_7(%arg0: i32) -> (i32, i32) {
    %c0_i32 = arith.constant 0 : i32
    %c0_i32_0 = arith.constant 0 : i32
    return %arg0, %c0_i32 : i32, i32
  }
}

module attributes {stable_mosaic.version = 11 : i64} {
  func.func @_cell_prop_cls_kernel(%arg0: i32, %arg1: i32, %arg2: memref<32x64xi8, #tpu.memory_space<vmem>>, %arg3: memref<64x128xbf16, #tpu.memory_space<vmem>>, %arg4: memref<32x1xf32, #tpu.memory_space<vmem>>, %arg5: memref<32x128xbf16, #tpu.memory_space<vmem>>, %arg6: memref<128x128xf32, #tpu.memory_space<vmem>>, %arg7: memref<1x128xf32, #tpu.memory_space<vmem>>, %arg8: memref<128x128xf32, #tpu.memory_space<vmem>>, %arg9: memref<1x128xf32, #tpu.memory_space<vmem>>, %arg10: memref<32x128xf32, #tpu.memory_space<vmem>>, %arg11: memref<32x128xf32, #tpu.memory_space<vmem>>) attributes {dimension_semantics = [#tpu.dimension_semantics<parallel>, #tpu.dimension_semantics<arbitrary>], iteration_bounds = array<i64: 2, 1>, scalar_prefetch = 0 : i64, scratch_operands = 1 : i64, tpu.core_type = #tpu.core_type<tc>, window_params = [{transform_indices = @transform_0, window_bounds = array<i64: 32, 64>}, {transform_indices = @transform_1, window_bounds = array<i64: 64, 128>}, {transform_indices = @transform_2, window_bounds = array<i64: 32, 1>}, {transform_indices = @transform_3, window_bounds = array<i64: 32, 128>}, {pipeline_mode = #tpu.pipeline_mode<synchronous>, transform_indices = @transform_4, window_bounds = array<i64: 128, 128>}, {pipeline_mode = #tpu.pipeline_mode<synchronous>, transform_indices = @transform_5, window_bounds = array<i64: 1, 128>}, {pipeline_mode = #tpu.pipeline_mode<synchronous>, transform_indices = @transform_6, window_bounds = array<i64: 128, 128>}, {pipeline_mode = #tpu.pipeline_mode<synchronous>, transform_indices = @transform_7, window_bounds = array<i64: 1, 128>}, {transform_indices = @transform_8, window_bounds = array<i64: 32, 128>}]} {
    %c0_i32 = arith.constant 0 : i32
    %0 = arith.cmpi eq, %arg1, %c0_i32 : i32
    %1 = arith.extui %0 : i1 to i32
    %c0_i32_0 = arith.constant 0 : i32
    %2 = arith.cmpi ne, %1, %c0_i32_0 : i32
    scf.if %2 {
      %cst_10 = arith.constant 0.000000e+00 : f32
      %13 = vector.broadcast %cst_10 : f32 to vector<32x128xf32>
      %c0_11 = arith.constant 0 : index
      %c0_12 = arith.constant 0 : index
      %14 = vector.load %arg11[%c0_11, %c0_12] : memref<32x128xf32, #tpu.memory_space<vmem>>, vector<32x128xf32>
      tpu.vector_store %arg11[%c0_11, %c0_12], %13 {strides = array<i32>} : memref<32x128xf32, #tpu.memory_space<vmem>>, vector<32x128xf32>,
    } else {
    }
    %c0 = arith.constant 0 : index
    %c0_1 = arith.constant 0 : index
    %3 = vector.load %arg11[%c0, %c0_1] : memref<32x128xf32, #tpu.memory_space<vmem>>, vector<32x128xf32>
    %c0_2 = arith.constant 0 : index
    %c0_3 = arith.constant 0 : index
    %4 = vector.load %arg2[%c0_2, %c0_3] : memref<32x64xi8, #tpu.memory_space<vmem>>, vector<32x64xi8>
    %5 = arith.sitofp %4 : vector<32x64xi8> to vector<32x64xbf16>
    %c0_4 = arith.constant 0 : index
    %c0_5 = arith.constant 0 : index
    %6 = vector.load %arg3[%c0_4, %c0_5] : memref<64x128xbf16, #tpu.memory_space<vmem>>, vector<64x128xbf16>
    %cst = arith.constant dense<0.000000e+00> : vector<32x128xf32>
    %7 = tpu.matmul %5, %6, %cst {dimension_numbers = #tpu.dot_dimension_numbers<[1], [0], [0], [1], [0, 0, 1, 1], [], []>} : vector<32x64xbf16>, vector<64x128xbf16>, vector<32x128xf32> -> vector<32x128xf32>
    %8 = arith.addf %3, %7 : vector<32x128xf32>
    %c0_6 = arith.constant 0 : index
    %c0_7 = arith.constant 0 : index
    %9 = vector.load %arg11[%c0_6, %c0_7] : memref<32x128xf32, #tpu.memory_space<vmem>>, vector<32x128xf32>
    tpu.vector_store %arg11[%c0_6, %c0_7], %8 {strides = array<i32>} : memref<32x128xf32, #tpu.memory_space<vmem>>, vector<32x128xf32>,
    %c0_i32_8 = arith.constant 0 : i32
    %10 = arith.cmpi eq, %arg1, %c0_i32_8 : i32
    %11 = arith.extui %10 : i1 to i32
    %c0_i32_9 = arith.constant 0 : i32
    %12 = arith.cmpi ne, %11, %c0_i32_9 : i32
    scf.if %12 {
      %c0_10 = arith.constant 0 : index
      %c0_11 = arith.constant 0 : index
      %13 = vector.load %arg11[%c0_10, %c0_11] : memref<32x128xf32, #tpu.memory_space<vmem>>, vector<32x128xf32>
      %c0_12 = arith.constant 0 : index
      %c0_13 = arith.constant 0 : index
      %14 = vector.load %arg4[%c0_12, %c0_13] : memref<32x1xf32, #tpu.memory_space<vmem>>, vector<32x1xf32>
      %15 = vector.broadcast %14 : vector<32x1xf32> to vector<32x128xf32>
      %16 = arith.mulf %13, %15 : vector<32x128xf32>
      %c0_14 = arith.constant 0 : index
      %c0_15 = arith.constant 0 : index
      %17 = vector.load %arg5[%c0_14, %c0_15] : memref<32x128xbf16, #tpu.memory_space<vmem>>, vector<32x128xbf16>
      %18 = arith.extf %17 : vector<32x128xbf16> to vector<32x128xf32>
      %c0_16 = arith.constant 0 : index
      %c0_17 = arith.constant 0 : index
      %19 = vector.load %arg6[%c0_16, %c0_17] : memref<128x128xf32, #tpu.memory_space<vmem>>, vector<128x128xf32>
      %cst_18 = arith.constant dense<0.000000e+00> : vector<32x128xf32>
      %20 = tpu.matmul %18, %19, %cst_18 {dimension_numbers = #tpu.dot_dimension_numbers<[1], [0], [0], [1], [0, 0, 1, 1], [], []>} : vector<32x128xf32>, vector<128x128xf32>, vector<32x128xf32> -> vector<32x128xf32>
      %c0_19 = arith.constant 0 : index
      %c0_20 = arith.constant 0 : index
      %21 = vector.load %arg7[%c0_19, %c0_20] : memref<1x128xf32, #tpu.memory_space<vmem>>, vector<1x128xf32>
      %22 = vector.broadcast %21 : vector<1x128xf32> to vector<32x128xf32>
      %23 = arith.addf %20, %22 : vector<32x128xf32>
      %24 = arith.addf %16, %23 : vector<32x128xf32>
      %cst_21 = arith.constant 0.000000e+00 : f32
      %25 = vector.broadcast %cst_21 : f32 to vector<32x128xf32>
      %26 = arith.maximumf %24, %25 : vector<32x128xf32>
      %27 = arith.addf %18, %26 : vector<32x128xf32>
      %28 = math.tanh %27 : vector<32x128xf32>
      %c0_22 = arith.constant 0 : index
      %c0_23 = arith.constant 0 : index
      %29 = vector.load %arg8[%c0_22, %c0_23] : memref<128x128xf32, #tpu.memory_space<vmem>>, vector<128x128xf32>
      %cst_24 = arith.constant dense<0.000000e+00> : vector<32x128xf32>
      %30 = tpu.matmul %28, %29, %cst_24 {dimension_numbers = #tpu.dot_dimension_numbers<[1], [0], [0], [1], [0, 0, 1, 1], [], []>} : vector<32x128xf32>, vector<128x128xf32>, vector<32x128xf32> -> vector<32x128xf32>
      %c0_25 = arith.constant 0 : index
      %c0_26 = arith.constant 0 : index
      %31 = vector.load %arg9[%c0_25, %c0_26] : memref<1x128xf32, #tpu.memory_space<vmem>>, vector<1x128xf32>
      %32 = vector.broadcast %31 : vector<1x128xf32> to vector<32x128xf32>
      %33 = arith.addf %30, %32 : vector<32x128xf32>
      %cst_27 = arith.constant dense<0xFF800000> : vector<32xf32>
      %34 = vector.multi_reduction <maximumf>, %33, %cst_27 [1] : vector<32x128xf32> to vector<32xf32>
      %35 = vector.shape_cast %34 : vector<32xf32> to vector<32x1xf32>
      %36 = vector.broadcast %35 : vector<32x1xf32> to vector<32x128xf32>
      %37 = arith.subf %33, %36 : vector<32x128xf32>
      %38 = math.exp %37 : vector<32x128xf32>
      %cst_28 = arith.constant dense<0.000000e+00> : vector<32xf32>
      %39 = vector.multi_reduction <add>, %38, %cst_28 [1] : vector<32x128xf32> to vector<32xf32>
      %40 = vector.shape_cast %39 : vector<32xf32> to vector<32x1xf32>
      %41 = math.log %40 : vector<32x1xf32>
      %42 = vector.broadcast %41 : vector<32x1xf32> to vector<32x128xf32>
      %43 = arith.subf %37, %42 : vector<32x128xf32>
      %c0_29 = arith.constant 0 : index
      %c0_30 = arith.constant 0 : index
      %44 = vector.load %arg10[%c0_29, %c0_30] : memref<32x128xf32, #tpu.memory_space<vmem>>, vector<32x128xf32>
      tpu.vector_store %arg10[%c0_29, %c0_30], %43 {strides = array<i32>} : memref<32x128xf32, #tpu.memory_space<vmem>>, vector<32x128xf32>,
    } else {
    }
    return
  }
  func.func @transform_0(%arg0: i32, %arg1: i32) -> (i32, i32) {
    %c0_i32 = arith.constant 0 : i32
    return %arg0, %arg1 : i32, i32
  }
  func.func @transform_1(%arg0: i32, %arg1: i32) -> (i32, i32) {
    %c0_i32 = arith.constant 0 : i32
    %c0_i32_0 = arith.constant 0 : i32
    return %arg1, %c0_i32 : i32, i32
  }
  func.func @transform_2(%arg0: i32, %arg1: i32) -> (i32, i32) {
    %c0_i32 = arith.constant 0 : i32
    %c0_i32_0 = arith.constant 0 : i32
    return %arg0, %c0_i32 : i32, i32
  }
  func.func @transform_3(%arg0: i32, %arg1: i32) -> (i32, i32) {
    %c0_i32 = arith.constant 0 : i32
    %c0_i32_0 = arith.constant 0 : i32
    return %arg0, %c0_i32 : i32, i32
  }
  func.func @transform_4(%arg0: i32, %arg1: i32) -> (i32, i32) {
    %c0_i32 = arith.constant 0 : i32
    %c0_i32_0 = arith.constant 0 : i32
    %c0_i32_1 = arith.constant 0 : i32
    return %c0_i32, %c0_i32_0 : i32, i32
  }
  func.func @transform_5(%arg0: i32, %arg1: i32) -> (i32, i32) {
    %c0_i32 = arith.constant 0 : i32
    %c0_i32_0 = arith.constant 0 : i32
    %c0_i32_1 = arith.constant 0 : i32
    return %c0_i32, %c0_i32_0 : i32, i32
  }
  func.func @transform_6(%arg0: i32, %arg1: i32) -> (i32, i32) {
    %c0_i32 = arith.constant 0 : i32
    %c0_i32_0 = arith.constant 0 : i32
    %c0_i32_1 = arith.constant 0 : i32
    return %c0_i32, %c0_i32_0 : i32, i32
  }
  func.func @transform_7(%arg0: i32, %arg1: i32) -> (i32, i32) {
    %c0_i32 = arith.constant 0 : i32
    %c0_i32_0 = arith.constant 0 : i32
    %c0_i32_1 = arith.constant 0 : i32
    return %c0_i32, %c0_i32_0 : i32, i32
  }
  func.func @transform_8(%arg0: i32, %arg1: i32) -> (i32, i32) {
    %c0_i32 = arith.constant 0 : i32
    %c0_i32_0 = arith.constant 0 : i32
    return %arg0, %c0_i32 : i32, i32
  }
}

module attributes {stable_mosaic.version = 11 : i64} {
  func.func @_cell_prop_kernel(%arg0: i32, %arg1: i32, %arg2: memref<32x64xi8, #tpu.memory_space<vmem>>, %arg3: memref<64x128xbf16, #tpu.memory_space<vmem>>, %arg4: memref<32x1xf32, #tpu.memory_space<vmem>>, %arg5: memref<32x128xbf16, #tpu.memory_space<vmem>>, %arg6: memref<128x128xf32, #tpu.memory_space<vmem>>, %arg7: memref<1x128xf32, #tpu.memory_space<vmem>>, %arg8: memref<32x128xf32, #tpu.memory_space<vmem>>, %arg9: memref<32x128xf32, #tpu.memory_space<vmem>>) attributes {dimension_semantics = [#tpu.dimension_semantics<parallel>, #tpu.dimension_semantics<arbitrary>], iteration_bounds = array<i64: 2, 1>, scalar_prefetch = 0 : i64, scratch_operands = 1 : i64, tpu.core_type = #tpu.core_type<tc>, window_params = [{transform_indices = @transform_0, window_bounds = array<i64: 32, 64>}, {transform_indices = @transform_1, window_bounds = array<i64: 64, 128>}, {transform_indices = @transform_2, window_bounds = array<i64: 32, 1>}, {transform_indices = @transform_3, window_bounds = array<i64: 32, 128>}, {pipeline_mode = #tpu.pipeline_mode<synchronous>, transform_indices = @transform_4, window_bounds = array<i64: 128, 128>}, {pipeline_mode = #tpu.pipeline_mode<synchronous>, transform_indices = @transform_5, window_bounds = array<i64: 1, 128>}, {transform_indices = @transform_6, window_bounds = array<i64: 32, 128>}]} {
    %c0_i32 = arith.constant 0 : i32
    %0 = arith.cmpi eq, %arg1, %c0_i32 : i32
    %1 = arith.extui %0 : i1 to i32
    %c0_i32_0 = arith.constant 0 : i32
    %2 = arith.cmpi ne, %1, %c0_i32_0 : i32
    scf.if %2 {
      %cst_10 = arith.constant 0.000000e+00 : f32
      %13 = vector.broadcast %cst_10 : f32 to vector<32x128xf32>
      %c0_11 = arith.constant 0 : index
      %c0_12 = arith.constant 0 : index
      %14 = vector.load %arg9[%c0_11, %c0_12] : memref<32x128xf32, #tpu.memory_space<vmem>>, vector<32x128xf32>
      tpu.vector_store %arg9[%c0_11, %c0_12], %13 {strides = array<i32>} : memref<32x128xf32, #tpu.memory_space<vmem>>, vector<32x128xf32>,
    } else {
    }
    %c0 = arith.constant 0 : index
    %c0_1 = arith.constant 0 : index
    %3 = vector.load %arg9[%c0, %c0_1] : memref<32x128xf32, #tpu.memory_space<vmem>>, vector<32x128xf32>
    %c0_2 = arith.constant 0 : index
    %c0_3 = arith.constant 0 : index
    %4 = vector.load %arg2[%c0_2, %c0_3] : memref<32x64xi8, #tpu.memory_space<vmem>>, vector<32x64xi8>
    %5 = arith.sitofp %4 : vector<32x64xi8> to vector<32x64xbf16>
    %c0_4 = arith.constant 0 : index
    %c0_5 = arith.constant 0 : index
    %6 = vector.load %arg3[%c0_4, %c0_5] : memref<64x128xbf16, #tpu.memory_space<vmem>>, vector<64x128xbf16>
    %cst = arith.constant dense<0.000000e+00> : vector<32x128xf32>
    %7 = tpu.matmul %5, %6, %cst {dimension_numbers = #tpu.dot_dimension_numbers<[1], [0], [0], [1], [0, 0, 1, 1], [], []>} : vector<32x64xbf16>, vector<64x128xbf16>, vector<32x128xf32> -> vector<32x128xf32>
    %8 = arith.addf %3, %7 : vector<32x128xf32>
    %c0_6 = arith.constant 0 : index
    %c0_7 = arith.constant 0 : index
    %9 = vector.load %arg9[%c0_6, %c0_7] : memref<32x128xf32, #tpu.memory_space<vmem>>, vector<32x128xf32>
    tpu.vector_store %arg9[%c0_6, %c0_7], %8 {strides = array<i32>} : memref<32x128xf32, #tpu.memory_space<vmem>>, vector<32x128xf32>,
    %c0_i32_8 = arith.constant 0 : i32
    %10 = arith.cmpi eq, %arg1, %c0_i32_8 : i32
    %11 = arith.extui %10 : i1 to i32
    %c0_i32_9 = arith.constant 0 : i32
    %12 = arith.cmpi ne, %11, %c0_i32_9 : i32
    scf.if %12 {
      %c0_10 = arith.constant 0 : index
      %c0_11 = arith.constant 0 : index
      %13 = vector.load %arg9[%c0_10, %c0_11] : memref<32x128xf32, #tpu.memory_space<vmem>>, vector<32x128xf32>
      %c0_12 = arith.constant 0 : index
      %c0_13 = arith.constant 0 : index
      %14 = vector.load %arg4[%c0_12, %c0_13] : memref<32x1xf32, #tpu.memory_space<vmem>>, vector<32x1xf32>
      %15 = vector.broadcast %14 : vector<32x1xf32> to vector<32x128xf32>
      %16 = arith.mulf %13, %15 : vector<32x128xf32>
      %c0_14 = arith.constant 0 : index
      %c0_15 = arith.constant 0 : index
      %17 = vector.load %arg5[%c0_14, %c0_15] : memref<32x128xbf16, #tpu.memory_space<vmem>>, vector<32x128xbf16>
      %18 = arith.extf %17 : vector<32x128xbf16> to vector<32x128xf32>
      %c0_16 = arith.constant 0 : index
      %c0_17 = arith.constant 0 : index
      %19 = vector.load %arg6[%c0_16, %c0_17] : memref<128x128xf32, #tpu.memory_space<vmem>>, vector<128x128xf32>
      %cst_18 = arith.constant dense<0.000000e+00> : vector<32x128xf32>
      %20 = tpu.matmul %18, %19, %cst_18 {dimension_numbers = #tpu.dot_dimension_numbers<[1], [0], [0], [1], [0, 0, 1, 1], [], []>} : vector<32x128xf32>, vector<128x128xf32>, vector<32x128xf32> -> vector<32x128xf32>
      %c0_19 = arith.constant 0 : index
      %c0_20 = arith.constant 0 : index
      %21 = vector.load %arg7[%c0_19, %c0_20] : memref<1x128xf32, #tpu.memory_space<vmem>>, vector<1x128xf32>
      %22 = vector.broadcast %21 : vector<1x128xf32> to vector<32x128xf32>
      %23 = arith.addf %20, %22 : vector<32x128xf32>
      %24 = arith.addf %16, %23 : vector<32x128xf32>
      %cst_21 = arith.constant 0.000000e+00 : f32
      %25 = vector.broadcast %cst_21 : f32 to vector<32x128xf32>
      %26 = arith.maximumf %24, %25 : vector<32x128xf32>
      %27 = arith.addf %18, %26 : vector<32x128xf32>
      %28 = math.tanh %27 : vector<32x128xf32>
      %c0_22 = arith.constant 0 : index
      %c0_23 = arith.constant 0 : index
      %29 = vector.load %arg8[%c0_22, %c0_23] : memref<32x128xf32, #tpu.memory_space<vmem>>, vector<32x128xf32>
      tpu.vector_store %arg8[%c0_22, %c0_23], %28 {strides = array<i32>} : memref<32x128xf32, #tpu.memory_space<vmem>>, vector<32x128xf32>,
    } else {
    }
    return
  }
  func.func @transform_0(%arg0: i32, %arg1: i32) -> (i32, i32) {
    %c0_i32 = arith.constant 0 : i32
    return %arg0, %arg1 : i32, i32
  }
  func.func @transform_1(%arg0: i32, %arg1: i32) -> (i32, i32) {
    %c0_i32 = arith.constant 0 : i32
    %c0_i32_0 = arith.constant 0 : i32
    return %arg1, %c0_i32 : i32, i32
  }
  func.func @transform_2(%arg0: i32, %arg1: i32) -> (i32, i32) {
    %c0_i32 = arith.constant 0 : i32
    %c0_i32_0 = arith.constant 0 : i32
    return %arg0, %c0_i32 : i32, i32
  }
  func.func @transform_3(%arg0: i32, %arg1: i32) -> (i32, i32) {
    %c0_i32 = arith.constant 0 : i32
    %c0_i32_0 = arith.constant 0 : i32
    return %arg0, %c0_i32 : i32, i32
  }
  func.func @transform_4(%arg0: i32, %arg1: i32) -> (i32, i32) {
    %c0_i32 = arith.constant 0 : i32
    %c0_i32_0 = arith.constant 0 : i32
    %c0_i32_1 = arith.constant 0 : i32
    return %c0_i32, %c0_i32_0 : i32, i32
  }
  func.func @transform_5(%arg0: i32, %arg1: i32) -> (i32, i32) {
    %c0_i32 = arith.constant 0 : i32
    %c0_i32_0 = arith.constant 0 : i32
    %c0_i32_1 = arith.constant 0 : i32
    return %c0_i32, %c0_i32_0 : i32, i32
  }
  func.func @transform_6(%arg0: i32, %arg1: i32) -> (i32, i32) {
    %c0_i32 = arith.constant 0 : i32
    %c0_i32_0 = arith.constant 0 : i32
    return %arg0, %c0_i32 : i32, i32
  }
}

</mosaic_0001>

<llo_original>
// kernel: nas_phy10000_forward.4
$region0: #{nas_phy10000_forward.4}
  #allocation0 [shape = 'u32[]', space=smem, size = 0x4, offset = 0x4, fixed_abs, tag = 'smem constant byte address 0x4 - core index']
  #allocation1 [shape = 'u32[72,128]{1,0:T(1,128)}', space=vmem, size = 0x9000, scoped, tag = 'internal scratch']
  %s0 = inlined_call_operand.vmem [shape: f32[64,128], index: 0, kind: input, shape index: {}]
  %s1 = inlined_call_operand.vmem [shape: f32[128,128], index: 1, kind: input, shape index: {}]
  %s2 = inlined_call_operand.vmem [shape: f32[1,128], index: 2, kind: input, shape index: {}]
  %s3 = inlined_call_operand.vmem [shape: f32[128,128], index: 3, kind: input, shape index: {}]
  %s4 = inlined_call_operand.vmem [shape: f32[1,128], index: 4, kind: input, shape index: {}]
  %s5 = inlined_call_operand.vmem [shape: f32[128,128], index: 5, kind: input, shape index: {}]
  %s6 = inlined_call_operand.vmem [shape: bf16[64,128], index: 6, kind: output, shape index: {0}]
  %s7 = inlined_call_operand.vmem [shape: bf16[64,128], index: 7, kind: output, shape index: {1}]
  %8 = xla_tuple %s6, %s7
  %s9 = sld [smem:[#allocation0]]
  $region65: #{nas_phy10000_forward.4} parent=0
    _
  %s11 = ssub.s32 1, %s9
  %s12 = scalar_select 0, %s11, %s9
  loop: start=0, step=1, limit=4
  $region2: #{nas_phy10000_forward.4} parent=0 // loop_pre_header
    _
  $region3: #{nas_phy10000_forward.4} parent=0 // loop_header
    %s14 = sphi 0, %s18
    %p15 = scmp.ge.s32.totalorder %s14, 4
    %s24 = sphi 0, %s26
    %s27 = sphi 0, %s24
    %s28 = sphi 0, %s27
    %s44 = sphi 0, %s28
    %s48 = sphi 0, %s48
    %s50 = sphi 0, %s48
    %s51 = sphi 0, %s50
    %s65 = sphi 0, %s51
    %s69 = sphi 0, %s69
    %s71 = sphi 0, %s69
    %s72 = sphi 0, %s71
    %s86 = sphi 0, %s72
    %s90 = sphi 0, %s90
    %s92 = sphi 0, %s90
    %s93 = sphi 0, %s92
    %s107 = sphi 0, %s93
    %s111 = sphi 0, %s111
    %s113 = sphi 0, %s111
    %s114 = sphi 0, %s113
    %s128 = sphi 0, %s114
    %s132 = sphi 0, %s132
    %s134 = sphi 0, %s132
    %s135 = sphi 0, %s134
    %s149 = sphi 0, %s135
    %s155 = sphi 0, %s157
    %s158 = sphi 0, %s155
    %s159 = sphi 0, %s158
    %s175 = sphi 0, %s159
    %s181 = sphi 0, %s183
    %s184 = sphi 0, %s181
    %s185 = sphi 0, %s184
    %s201 = sphi 0, %s185
  $region4: #{nas_phy10000_forward.4} parent=0 // loop_header_branch
    %17 = sbr.rel (%p15) target = $region8
  $region5: #{nas_phy10000_forward.4} parent=0 // loop_body
    %s19 = ssub.s32 %s14, 1
    %s20 = ssub.s32 %s14, 2
    %s21 = sadd.s32 %s14, 1
    %s22 = ssub.s32 %s14, %s21
    %p23 = scmp.eq.s32.totalorder %s22, 0
    %s25 = sadd.s32 %s24, 1
    %s26 = scalar_select %p23, %s24, %s25
    %p29 = pneg %p23
    %p30 = scmp.eq.s32.totalorder %s14, 1
    %p31 = por %p29, %p30
    %p32 = scmp.ne.s32.totalorder %s24, %s27
    %p33 = scmp.eq.s32.totalorder %s14, 0
    %p34 = por %p32, %p33
    %p35 = scmp.ne.s32.totalorder %s24, %s27
    %p36 = scmp.eq.s32.totalorder %s19, 1
    %p37 = por %p35, %p36
    %p38 = scmp.ne.s32.totalorder %s27, %s28
    %p39 = scmp.eq.s32.totalorder %s19, 0
    %p40 = por %p38, %p39
    %p41 = scmp.ne.s32.totalorder %s27, %s28
    %p42 = scmp.eq.s32.totalorder %s20, 1
    %p43 = por %p41, %p42
    %p45 = scmp.ne.s32.totalorder %s28, %s44
    %p46 = scmp.eq.s32.totalorder %s20, 0
    %p47 = por %p45, %p46
    %s49 = sadd.s32 %s48, 1
    %p52 = scmp.eq.s32.totalorder %s14, 1
    %p53 = scmp.ne.s32.totalorder %s48, %s50
    %p54 = scmp.eq.s32.totalorder %s14, 0
    %p55 = por %p53, %p54
    %p56 = scmp.ne.s32.totalorder %s48, %s50
    %p57 = scmp.eq.s32.totalorder %s19, 1
    %p58 = por %p56, %p57
    %p59 = scmp.ne.s32.totalorder %s50, %s51
    %p60 = scmp.eq.s32.totalorder %s19, 0
    %p61 = por %p59, %p60
    %p62 = scmp.ne.s32.totalorder %s50, %s51
    %p63 = scmp.eq.s32.totalorder %s20, 1
    %p64 = por %p62, %p63
    %p66 = scmp.ne.s32.totalorder %s51, %s65
    %p67 = scmp.eq.s32.totalorder %s20, 0
    %p68 = por %p66, %p67
    %s70 = sadd.s32 %s69, 1
    %p73 = scmp.eq.s32.totalorder %s14, 1
    %p74 = scmp.ne.s32.totalorder %s69, %s71
    %p75 = scmp.eq.s32.totalorder %s14, 0
    %p76 = por %p74, %p75
    %p77 = scmp.ne.s32.totalorder %s69, %s71
    %p78 = scmp.eq.s32.totalorder %s19, 1
    %p79 = por %p77, %p78
    %p80 = scmp.ne.s32.totalorder %s71, %s72
    %p81 = scmp.eq.s32.totalorder %s19, 0
    %p82 = por %p80, %p81
    %p83 = scmp.ne.s32.totalorder %s71, %s72
    %p84 = scmp.eq.s32.totalorder %s20, 1
    %p85 = por %p83, %p84
    %p87 = scmp.ne.s32.totalorder %s72, %s86
    %p88 = scmp.eq.s32.totalorder %s20, 0
    %p89 = por %p87, %p88
    %s91 = sadd.s32 %s90, 1
    %p94 = scmp.eq.s32.totalorder %s14, 1
    %p95 = scmp.ne.s32.totalorder %s90, %s92
    %p96 = scmp.eq.s32.totalorder %s14, 0
    %p97 = por %p95, %p96
    %p98 = scmp.ne.s32.totalorder %s90, %s92
    %p99 = scmp.eq.s32.totalorder %s19, 1
    %p100 = por %p98, %p99
    %p101 = scmp.ne.s32.totalorder %s92, %s93
    %p102 = scmp.eq.s32.totalorder %s19, 0
    %p103 = por %p101, %p102
    %p104 = scmp.ne.s32.totalorder %s92, %s93
    %p105 = scmp.eq.s32.totalorder %s20, 1
    %p106 = por %p104, %p105
    %p108 = scmp.ne.s32.totalorder %s93, %s107
    %p109 = scmp.eq.s32.totalorder %s20, 0
    %p110 = por %p108, %p109
    %s112 = sadd.s32 %s111, 1
    %p115 = scmp.eq.s32.totalorder %s14, 1
    %p116 = scmp.ne.s32.totalorder %s111, %s113
    %p117 = scmp.eq.s32.totalorder %s14, 0
    %p118 = por %p116, %p117
    %p119 = scmp.ne.s32.totalorder %s111, %s113
    %p120 = scmp.eq.s32.totalorder %s19, 1
    %p121 = por %p119, %p120
    %p122 = scmp.ne.s32.totalorder %s113, %s114
    %p123 = scmp.eq.s32.totalorder %s19, 0
    %p124 = por %p122, %p123
    %p125 = scmp.ne.s32.totalorder %s113, %s114
    %p126 = scmp.eq.s32.totalorder %s20, 1
    %p127 = por %p125, %p126
    %p129 = scmp.ne.s32.totalorder %s114, %s128
    %p130 = scmp.eq.s32.totalorder %s20, 0
    %p131 = por %p129, %p130
    %s133 = sadd.s32 %s132, 1
    %p136 = scmp.eq.s32.totalorder %s14, 1
    %p137 = scmp.ne.s32.totalorder %s132, %s134
    %p138 = scmp.eq.s32.totalorder %s14, 0
    %p139 = por %p137, %p138
    %p140 = scmp.ne.s32.totalorder %s132, %s134
    %p141 = scmp.eq.s32.totalorder %s19, 1
    %p142 = por %p140, %p141
    %p143 = scmp.ne.s32.totalorder %s134, %s135
    %p144 = scmp.eq.s32.totalorder %s19, 0
    %p145 = por %p143, %p144
    %p146 = scmp.ne.s32.totalorder %s134, %s135
    %p147 = scmp.eq.s32.totalorder %s20, 1
    %p148 = por %p146, %p147
    %p150 = scmp.ne.s32.totalorder %s135, %s149
    %p151 = scmp.eq.s32.totalorder %s20, 0
    %p152 = por %p150, %p151
    %s153 = ssub.s32 %s14, %s21
    %p154 = scmp.eq.s32.totalorder %s153, 0
    %s156 = sadd.s32 %s155, 1
    %s157 = scalar_select %p154, %s155, %s156
    %p160 = pneg %p154
    %p161 = scmp.eq.s32.totalorder %s14, 1
    %p162 = por %p160, %p161
    %p163 = scmp.ne.s32.totalorder %s155, %s158
    %p164 = scmp.eq.s32.totalorder %s14, 0
    %p165 = por %p163, %p164
    %p166 = scmp.ne.s32.totalorder %s155, %s158
    %p167 = scmp.eq.s32.totalorder %s19, 1
    %p168 = por %p166, %p167
    %p169 = scmp.ne.s32.totalorder %s158, %s159
    %p170 = scmp.eq.s32.totalorder %s19, 0
    %p171 = por %p169, %p170
    %p172 = scmp.ne.s32.totalorder %s158, %s159
    %p173 = scmp.eq.s32.totalorder %s20, 1
    %p174 = por %p172, %p173
    %p176 = scmp.ne.s32.totalorder %s159, %s175
    %p177 = scmp.eq.s32.totalorder %s20, 0
    %p178 = por %p176, %p177
    %s179 = ssub.s32 %s14, %s21
    %p180 = scmp.eq.s32.totalorder %s179, 0
    %s182 = sadd.s32 %s181, 1
    %s183 = scalar_select %p180, %s181, %s182
    %p186 = pneg %p180
    %p187 = scmp.eq.s32.totalorder %s14, 1
    %p188 = por %p186, %p187
    %p189 = scmp.ne.s32.totalorder %s181, %s184
    %p190 = scmp.eq.s32.totalorder %s14, 0
    %p191 = por %p189, %p190
    %p192 = scmp.ne.s32.totalorder %s181, %s184
    %p193 = scmp.eq.s32.totalorder %s19, 1
    %p194 = por %p192, %p193
    %p195 = scmp.ne.s32.totalorder %s184, %s185
    %p196 = scmp.eq.s32.totalorder %s19, 0
    %p197 = por %p195, %p196
    %p198 = scmp.ne.s32.totalorder %s184, %s185
    %p199 = scmp.eq.s32.totalorder %s20, 1
    %p200 = por %p198, %p199
    %p202 = scmp.ne.s32.totalorder %s185, %s201
    %p203 = scmp.eq.s32.totalorder %s20, 0
    %p204 = por %p202, %p203
    %p205 = scmp.le.s32.totalorder 1, %s14
    %p206 = scmp.lt.s32.totalorder %s14, 3
    %p207 = pnand %p205, %p206
    %p208 = pneg %p207
    // Predicated region
    $region9: #{nas_phy10000_forward.4} parent=5 // pred_check
      _
    $region10: #{nas_phy10000_forward.4} parent=5 // pred_check_branch
      %210 = sbr.rel (%p207) target = $region12
    $region11: #{nas_phy10000_forward.4} parent=5 // pred_region
      %s211 = ssub.s32 %s14, 1
      // Predicated region
      $region13: #{nas_phy10000_forward.4} parent=11 // pred_check
        %p212 = pneg %p61
      $region14: #{nas_phy10000_forward.4} parent=11 // pred_check_branch
        %214 = sbr.rel (%p212) target = $region16
      $region15: #{nas_phy10000_forward.4} parent=11 // pred_region
        _
      $region16: #{nas_phy10000_forward.4} parent=11 // pred_fallthru
        _
      // Predicated region
      $region17: #{nas_phy10000_forward.4} parent=11 // pred_check
        %p215 = pneg %p82
      $region18: #{nas_phy10000_forward.4} parent=11 // pred_check_branch
        %217 = sbr.rel (%p215) target = $region20
      $region19: #{nas_phy10000_forward.4} parent=11 // pred_region
        _
      $region20: #{nas_phy10000_forward.4} parent=11 // pred_fallthru
        _
      // Predicated region
      $region21: #{nas_phy10000_forward.4} parent=11 // pred_check
        %p218 = pneg %p103
      $region22: #{nas_phy10000_forward.4} parent=11 // pred_check_branch
        %220 = sbr.rel (%p218) target = $region24
      $region23: #{nas_phy10000_forward.4} parent=11 // pred_region
        _
      $region24: #{nas_phy10000_forward.4} parent=11 // pred_fallthru
        _
      // Predicated region
      $region25: #{nas_phy10000_forward.4} parent=11 // pred_check
        %p221 = pneg %p124
      $region26: #{nas_phy10000_forward.4} parent=11 // pred_check_branch
        %223 = sbr.rel (%p221) target = $region28
      $region27: #{nas_phy10000_forward.4} parent=11 // pred_region
        _
      $region28: #{nas_phy10000_forward.4} parent=11 // pred_fallthru
        _
      // Predicated region
      $region29: #{nas_phy10000_forward.4} parent=11 // pred_check
        %p224 = pneg %p145
      $region30: #{nas_phy10000_forward.4} parent=11 // pred_check_branch
        %226 = sbr.rel (%p224) target = $region32
      $region31: #{nas_phy10000_forward.4} parent=11 // pred_region
        _
      $region32: #{nas_phy10000_forward.4} parent=11 // pred_fallthru
        _
    $region12: #{nas_phy10000_forward.4} parent=5 // pred_fallthru
      _
    %p227 = scmp.lt.s32.totalorder %s14, 2
    // Predicated region
    $region33: #{nas_phy10000_forward.4} parent=5 // pred_check
      %p228 = pneg %p227
    $region34: #{nas_phy10000_forward.4} parent=5 // pred_check_branch
      %230 = sbr.rel (%p228) target = $region36
    $region35: #{nas_phy10000_forward.4} parent=5 // pred_region
      // Predicated region
      $region37: #{nas_phy10000_forward.4} parent=35 // pred_check
        %p231 = pneg %p34
      $region38: #{nas_phy10000_forward.4} parent=35 // pred_check_branch
        %233 = sbr.rel (%p231) target = $region40
      $region39: #{nas_phy10000_forward.4} parent=35 // pred_region
        %s234 = smul.u32 4, %s14
        %p235 = scmp.lt.s32.totalorder %s234, 7
        %s236 = scalar_select %p235, %s234, 7
        %s237 = smul.addr %s236, 8
        %s238 = scalar_lea.vmem %s0, %s237
        %s239 = smul.u32 4, %s14
      $region40: #{nas_phy10000_forward.4} parent=35 // pred_fallthru
        _
    $region36: #{nas_phy10000_forward.4} parent=5 // pred_fallthru
      _
    %p240 = scmp.le.s32.totalorder 1, %s14
    %p241 = scmp.lt.s32.totalorder %s14, 3
    %p242 = pnand %p240, %p241
    %p243 = pneg %p242
    // Predicated region
    $region41: #{nas_phy10000_forward.4} parent=5 // pred_check
      _
    $region42: #{nas_phy10000_forward.4} parent=5 // pred_check_branch
      %245 = sbr.rel (%p242) target = $region44
    $region43: #{nas_phy10000_forward.4} parent=5 // pred_region
      %s246 = ssub.s32 %s14, 1
      %s247 = smul.u32 4, %s19
      %p248 = scmp.lt.s32.totalorder %s247, 7
      %s249 = scalar_select %p248, %s247, 7
      %s250 = smul.addr %s249, 8
      %s251 = scalar_lea.vmem %s0, %s250
      %p252 = pneg %p40
      %p253 = pneg %p37
      %p254 = pneg %p61
      %p255 = pneg %p58
      %p256 = pneg %p82
      %p257 = pneg %p79
      %p258 = pneg %p103
      %p259 = pneg %p100
      %p260 = pneg %p124
      %p261 = pneg %p121
      %p262 = pneg %p145
      %p263 = pneg %p142
      %p264 = pneg %p171
      %p265 = pneg %p168
      %s266 = smul.u32 4, %s19
      %p267 = scmp.lt.s32.totalorder %s266, 7
      %s268 = scalar_select %p267, %s266, 7
      %s269 = smul.addr %s268, 4
      %s270 = scalar_lea.vmem %s6, %s269
      %p271 = pneg %p197
      %p272 = pneg %p194
      %s273 = smul.u32 4, %s19
      %p274 = scmp.lt.s32.totalorder %s273, 7
      %s275 = scalar_select %p274, %s273, 7
      %s276 = smul.addr %s275, 4
      %s277 = scalar_lea.vmem %s7, %s276
      %s278 = smul.u32 4, %s19
      %p279 = scmp.lt.s32.totalorder %s278, 7
      %s280 = scalar_select %p279, %s278, 7
      %s281 = smul.addr %s280, 8
      %s282 = scalar_lea.vmem %s0, %s281
      %s283 = smul.u32 4, %s19
      %s284 = smul.u32 4, %s19
      %p285 = scmp.lt.s32.totalorder %s284, 7
      %s286 = scalar_select %p285, %s284, 7
      %s287 = smul.addr %s286, 4
      %s288 = scalar_lea.vmem %s6, %s287
      %s289 = smul.u32 4, %s19
      %s290 = smul.u32 4, %s19
      %p291 = scmp.lt.s32.totalorder %s290, 7
      %s292 = scalar_select %p291, %s290, 7
      %s293 = smul.addr %s292, 4
      %s294 = scalar_lea.vmem %s7, %s293
      %s295 = smul.u32 4, %s19
      %v296 = vld [vmem:[%s282] sm:$0xff]
      %v297 = vld [vmem:[%s282 + $0x8] sm:$0xff]
      %v298 = vld [vmem:[%s282 + $0x10] sm:$0xff]
      %v299 = vld [vmem:[%s282 + $0x18] sm:$0xff]
      %v300 = vld [vmem:[%s1] sm:$0xff]
      %v301 = vld [vmem:[%s1 + $0x8] sm:$0xff]
      %v302 = vld [vmem:[%s1 + $0x10] sm:$0xff]
      %v303 = vld [vmem:[%s1 + $0x18] sm:$0xff]
      %v304 = vld [vmem:[%s1 + $0x20] sm:$0xff]
      %v305 = vld [vmem:[%s1 + $0x28] sm:$0xff]
      %v306 = vld [vmem:[%s1 + $0x30] sm:$0xff]
      %v307 = vld [vmem:[%s1 + $0x38] sm:$0xff]
      %v308 = vld [vmem:[%s1 + $0x40] sm:$0xff]
      %v309 = vld [vmem:[%s1 + $0x48] sm:$0xff]
      %v310 = vld [vmem:[%s1 + $0x50] sm:$0xff]
      %v311 = vld [vmem:[%s1 + $0x58] sm:$0xff]
      %v312 = vld [vmem:[%s1 + $0x60] sm:$0xff]
      %v313 = vld [vmem:[%s1 + $0x68] sm:$0xff]
      %v314 = vld [vmem:[%s1 + $0x70] sm:$0xff]
      %v315 = vld [vmem:[%s1 + $0x78] sm:$0xff]
      %v316 = vld [vmem:[%s2] sm:$0x1]
      %v318 = vperm.slane %v316, 0
      %320 = vmatpush.msra.mxu0 %v315
      %321 = vmatpush.msra.mxu0 %v314
      %322 = vmatpush.msra.mxu0 %v313
      %323 = vmatpush.msra.mxu0 %v312
      %324 = vmatpush.msra.mxu0 %v311
      %325 = vmatpush.msra.mxu0 %v310
      %326 = vmatpush.msra.mxu0 %v309
      %327 = vmatpush.msra.mxu0 %v308
      %328 = vmatpush.msra.mxu0 %v307
      %329 = vmatpush.msra.mxu0 %v306
      %330 = vmatpush.msra.mxu0 %v305
      %331 = vmatpush.msra.mxu0 %v304
      %332 = vmatpush.msra.mxu0 %v303
      %333 = vmatpush.msra.mxu0 %v302
      %334 = vmatpush.msra.mxu0 %v301
      %335 = vmatpush.msra.mxu0 %v300
      %336 = vmatmul.f32.gmra.mxu0 %v296
      %v337 = vpop.f32.mrf.mxu0
      %v338 = vadd.f32 %v318, %v337
      %339 = vmatmul.f32.gmra.mxu0 %v297
      %v340 = vpop.f32.mrf.mxu0
      %v341 = vadd.f32 %v318, %v340
      %342 = vmatmul.f32.gmra.mxu0 %v298
      %v343 = vpop.f32.mrf.mxu0
      %v344 = vadd.f32 %v318, %v343
      %345 = vmatmul.f32.gmra.mxu0 %v299
      %v346 = vpop.f32.mrf.mxu0
      %v347 = vadd.f32 %v318, %v346
      %348 = vdwg.mxu0
      %v349 = vld [vmem:[%s3] sm:$0xff]
      %v350 = vld [vmem:[%s3 + $0x8] sm:$0xff]
      %v351 = vld [vmem:[%s3 + $0x10] sm:$0xff]
      %v352 = vld [vmem:[%s3 + $0x18] sm:$0xff]
      %v353 = vld [vmem:[%s3 + $0x20] sm:$0xff]
      %v354 = vld [vmem:[%s3 + $0x28] sm:$0xff]
      %v355 = vld [vmem:[%s3 + $0x30] sm:$0xff]
      %v356 = vld [vmem:[%s3 + $0x38] sm:$0xff]
      %v357 = vld [vmem:[%s3 + $0x40] sm:$0xff]
      %v358 = vld [vmem:[%s3 + $0x48] sm:$0xff]
      %v359 = vld [vmem:[%s3 + $0x50] sm:$0xff]
      %v360 = vld [vmem:[%s3 + $0x58] sm:$0xff]
      %v361 = vld [vmem:[%s3 + $0x60] sm:$0xff]
      %v362 = vld [vmem:[%s3 + $0x68] sm:$0xff]
      %v363 = vld [vmem:[%s3 + $0x70] sm:$0xff]
      %v364 = vld [vmem:[%s3 + $0x78] sm:$0xff]
      %v365 = vld [vmem:[%s4] sm:$0x1]
      %v367 = vperm.slane %v365, 0
      %369 = vmatpush.msra.mxu0 %v364
      %370 = vmatpush.msra.mxu0 %v363
      %371 = vmatpush.msra.mxu0 %v362
      %372 = vmatpush.msra.mxu0 %v361
      %373 = vmatpush.msra.mxu0 %v360
      %374 = vmatpush.msra.mxu0 %v359
      %375 = vmatpush.msra.mxu0 %v358
      %376 = vmatpush.msra.mxu0 %v357
      %377 = vmatpush.msra.mxu0 %v356
      %378 = vmatpush.msra.mxu0 %v355
      %379 = vmatpush.msra.mxu0 %v354
      %380 = vmatpush.msra.mxu0 %v353
      %381 = vmatpush.msra.mxu0 %v352
      %382 = vmatpush.msra.mxu0 %v351
      %383 = vmatpush.msra.mxu0 %v350
      %384 = vmatpush.msra.mxu0 %v349
      %385 = vmatmul.f32.gmra.mxu0 %v338
      %v386 = vpop.f32.mrf.mxu0
      %v387 = vadd.f32 %v367, %v386
      %388 = vmatmul.f32.gmra.mxu0 %v341
      %v389 = vpop.f32.mrf.mxu0
      %v390 = vadd.f32 %v367, %v389
      %391 = vmatmul.f32.gmra.mxu0 %v344
      %v392 = vpop.f32.mrf.mxu0
      %v393 = vadd.f32 %v367, %v392
      %394 = vmatmul.f32.gmra.mxu0 %v347
      %v395 = vpop.f32.mrf.mxu0
      %v396 = vadd.f32 %v367, %v395
      %397 = vdwg.mxu0
      %vm398 = vcmp.ge.f32.partialorder %v387, 0.0
      %vm399 = vcmp.ge.f32.partialorder %v390, 0.0
      %vm400 = vcmp.ge.f32.partialorder %v393, 0.0
      %vm401 = vcmp.ge.f32.partialorder %v396, 0.0
      %v402 = vmul.f32 %v387, 0.01
      %v403 = vmul.f32 %v390, 0.01
      %v404 = vmul.f32 %v393, 0.01
      %v405 = vmul.f32 %v396, 0.01
      %v406 = vsel %vm398, %v387, %v402
      %v407 = vsel %vm399, %v390, %v403
      %v408 = vsel %vm400, %v393, %v404
      %v409 = vsel %vm401, %v396, %v405
      %v410 = vld [vmem:[%s5] sm:$0xff]
      %v411 = vld [vmem:[%s5 + $0x8] sm:$0xff]
      %v412 = vld [vmem:[%s5 + $0x10] sm:$0xff]
      %v413 = vld [vmem:[%s5 + $0x18] sm:$0xff]
      %v414 = vld [vmem:[%s5 + $0x20] sm:$0xff]
      %v415 = vld [vmem:[%s5 + $0x28] sm:$0xff]
      %v416 = vld [vmem:[%s5 + $0x30] sm:$0xff]
      %v417 = vld [vmem:[%s5 + $0x38] sm:$0xff]
      %v418 = vld [vmem:[%s5 + $0x40] sm:$0xff]
      %v419 = vld [vmem:[%s5 + $0x48] sm:$0xff]
      %v420 = vld [vmem:[%s5 + $0x50] sm:$0xff]
      %v421 = vld [vmem:[%s5 + $0x58] sm:$0xff]
      %v422 = vld [vmem:[%s5 + $0x60] sm:$0xff]
      %v423 = vld [vmem:[%s5 + $0x68] sm:$0xff]
      %v424 = vld [vmem:[%s5 + $0x70] sm:$0xff]
      %v425 = vld [vmem:[%s5 + $0x78] sm:$0xff]
      %426 = vmatpush.msra.mxu0 %v425
      %427 = vmatpush.msra.mxu0 %v424
      %428 = vmatpush.msra.mxu0 %v423
      %429 = vmatpush.msra.mxu0 %v422
      %430 = vmatpush.msra.mxu0 %v421
      %431 = vmatpush.msra.mxu0 %v420
      %432 = vmatpush.msra.mxu0 %v419
      %433 = vmatpush.msra.mxu0 %v418
      %434 = vmatpush.msra.mxu0 %v417
      %435 = vmatpush.msra.mxu0 %v416
      %436 = vmatpush.msra.mxu0 %v415
      %437 = vmatpush.msra.mxu0 %v414
      %438 = vmatpush.msra.mxu0 %v413
      %439 = vmatpush.msra.mxu0 %v412
      %440 = vmatpush.msra.mxu0 %v411
      %441 = vmatpush.msra.mxu0 %v410
      %442 = vmatmul.f32.gmra.mxu0 %v406
      %v443 = vpop.f32.mrf.mxu0
      %v444 = vadd.f32 0.0, %v443
      %445 = vmatmul.f32.gmra.mxu0 %v407
      %v446 = vpop.f32.mrf.mxu0
      %v447 = vadd.f32 0.0, %v446
      %448 = vmatmul.f32.gmra.mxu0 %v408
      %v449 = vpop.f32.mrf.mxu0
      %v450 = vadd.f32 0.0, %v449
      %451 = vmatmul.f32.gmra.mxu0 %v409
      %v452 = vpop.f32.mrf.mxu0
      %v453 = vadd.f32 0.0, %v452
      %454 = vdwg.mxu0
      %v455 = vpack.c.bf16 %v406, %v406
      %v456 = vpack.c.bf16 %v407, %v407
      %v457 = vpack.c.bf16 %v408, %v408
      %v458 = vpack.c.bf16 %v409, %v409
      %459 = vst [vmem:[%s288] sm:$0xf] %v455
      %460 = vst [vmem:[%s288 + $0x4] sm:$0xf] %v456
      %461 = vst [vmem:[%s288 + $0x8] sm:$0xf] %v457
      %462 = vst [vmem:[%s288 + $0xc] sm:$0xf] %v458
      %v463 = vpack.c.bf16 %v444, %v444
      %v464 = vpack.c.bf16 %v447, %v447
      %v465 = vpack.c.bf16 %v450, %v450
      %v466 = vpack.c.bf16 %v453, %v453
      %467 = vst [vmem:[%s294] sm:$0xf] %v463
      %468 = vst [vmem:[%s294 + $0x4] sm:$0xf] %v464
      %469 = vst [vmem:[%s294 + $0x8] sm:$0xf] %v465
      %470 = vst [vmem:[%s294 + $0xc] sm:$0xf] %v466
      %s471 = smul.u32 4, %s19
      %p472 = scmp.lt.s32.totalorder %s471, 7
      %s473 = scalar_select %p472, %s471, 7
      %s474 = smul.addr %s473, 4
      %s475 = scalar_lea.vmem %s6, %s474
      %s476 = smul.u32 4, %s19
      %p477 = scmp.lt.s32.totalorder %s476, 7
      %s478 = scalar_select %p477, %s476, 7
      %s479 = smul.addr %s478, 4
      %s480 = scalar_lea.vmem %s7, %s479
      // Predicated region
      $region45: #{nas_phy10000_forward.4} parent=43 // pred_check
        %p481 = pneg %p168
      $region46: #{nas_phy10000_forward.4} parent=43 // pred_check_branch
        %483 = sbr.rel (%p481) target = $region48
      $region47: #{nas_phy10000_forward.4} parent=43 // pred_region
        %s484 = smul.u32 4, %s19
      $region48: #{nas_phy10000_forward.4} parent=43 // pred_fallthru
        _
      // Predicated region
      $region49: #{nas_phy10000_forward.4} parent=43 // pred_check
        %p485 = pneg %p194
      $region50: #{nas_phy10000_forward.4} parent=43 // pred_check_branch
        %487 = sbr.rel (%p485) target = $region52
      $region51: #{nas_phy10000_forward.4} parent=43 // pred_region
        %s488 = smul.u32 4, %s19
      $region52: #{nas_phy10000_forward.4} parent=43 // pred_fallthru
        _
    $region44: #{nas_phy10000_forward.4} parent=5 // pred_fallthru
      _
    %p489 = scmp.le.s32.totalorder 2, %s14
    // Predicated region
    $region53: #{nas_phy10000_forward.4} parent=5 // pred_check
      %p490 = pneg %p489
    $region54: #{nas_phy10000_forward.4} parent=5 // pred_check_branch
      %492 = sbr.rel (%p490) target = $region56
    $region55: #{nas_phy10000_forward.4} parent=5 // pred_region
      %s493 = ssub.s32 %s14, 2
      // Predicated region
      $region57: #{nas_phy10000_forward.4} parent=55 // pred_check
        %p494 = pneg %p174
      $region58: #{nas_phy10000_forward.4} parent=55 // pred_check_branch
        %496 = sbr.rel (%p494) target = $region60
      $region59: #{nas_phy10000_forward.4} parent=55 // pred_region
        %s497 = smul.u32 4, %s20
        %p498 = scmp.lt.s32.totalorder %s497, 7
        %s499 = scalar_select %p498, %s497, 7
        %s500 = smul.addr %s499, 4
        %s501 = scalar_lea.vmem %s6, %s500
      $region60: #{nas_phy10000_forward.4} parent=55 // pred_fallthru
        _
      // Predicated region
      $region61: #{nas_phy10000_forward.4} parent=55 // pred_check
        %p502 = pneg %p200
      $region62: #{nas_phy10000_forward.4} parent=55 // pred_check_branch
        %504 = sbr.rel (%p502) target = $region64
      $region63: #{nas_phy10000_forward.4} parent=55 // pred_region
        %s505 = smul.u32 4, %s20
        %p506 = scmp.lt.s32.totalorder %s505, 7
        %s507 = scalar_select %p506, %s505, 7
        %s508 = smul.addr %s507, 4
        %s509 = scalar_lea.vmem %s7, %s508
      $region64: #{nas_phy10000_forward.4} parent=55 // pred_fallthru
        _
    $region56: #{nas_phy10000_forward.4} parent=5 // pred_fallthru
      _
  $region6: #{nas_phy10000_forward.4} parent=0 // loop_footer
    %s18 = sadd.s32 1, %s14
  $region7: #{nas_phy10000_forward.4} parent=0 // loop_footer_branch
    %13 = sbr.rel target = $region3
  $region8: #{nas_phy10000_forward.4} parent=0 // loop_exit
    _

// kernel: nas_phy10000_forward.5
$region0: #{nas_phy10000_forward.5}
  #allocation0 [shape = 'u32[]', space=smem, size = 0x4, offset = 0x4, fixed_abs, tag = 'smem constant byte address 0x4 - core index']
  #allocation1 [shape = 'u32[72,128]{1,0:T(1,128)}', space=vmem, size = 0x9000, scoped, tag = 'internal scratch']
  #allocation2 [shape = 'f32[32,128]{1,0:T(8,128)}', space=vmem, size = 0x4000, scoped, tag = 'scratch operand']
  %s0 = inlined_call_operand.vmem [shape: s8[64,64], index: 0, kind: input, shape index: {}]
  %s1 = inlined_call_operand.vmem [shape: bf16[64,128], index: 1, kind: input, shape index: {}]
  %s2 = inlined_call_operand.vmem [shape: f32[64,1], index: 2, kind: input, shape index: {}]
  %s3 = inlined_call_operand.vmem [shape: bf16[64,128], index: 3, kind: input, shape index: {}]
  %s4 = inlined_call_operand.vmem [shape: f32[128,128], index: 4, kind: input, shape index: {}]
  %s5 = inlined_call_operand.vmem [shape: f32[1,128], index: 5, kind: input, shape index: {}]
  %s6 = inlined_call_operand.vmem [shape: f32[64,128], index: 6, kind: output, shape index: {}]
  %s7 = sld [smem:[#allocation0]]
  $region65: #{nas_phy10000_forward.5} parent=0
    _
  %s9 = ssub.s32 1, %s7
  %s10 = scalar_select 0, %s9, %s7
  loop: start=0, step=1, limit=4
  $region2: #{nas_phy10000_forward.5} parent=0 // loop_pre_header
    _
  $region3: #{nas_phy10000_forward.5} parent=0 // loop_header
    %s12 = sphi 0, %s16
    %p13 = scmp.ge.s32.totalorder %s12, 4
    %s19 = sphi 0, %s31
    %s20 = sphi 0, %s27
    %s21 = sphi 0, %s19
    %s22 = sphi 0, %s20
    %s23 = sphi 0, %s21
    %s24 = sphi 0, %s22
    %s36 = sphi 0, %s38
    %s39 = sphi 0, %s36
    %s40 = sphi 0, %s39
    %s56 = sphi 0, %s40
    %s62 = sphi 0, %s64
    %s65 = sphi 0, %s62
    %s66 = sphi 0, %s65
    %s82 = sphi 0, %s66
    %s88 = sphi 0, %s90
    %s91 = sphi 0, %s88
    %s92 = sphi 0, %s91
    %s108 = sphi 0, %s92
    %s114 = sphi 0, %s116
    %s117 = sphi 0, %s114
    %s118 = sphi 0, %s117
    %s134 = sphi 0, %s118
    %s138 = sphi 0, %s138
    %s140 = sphi 0, %s138
    %s141 = sphi 0, %s140
    %s155 = sphi 0, %s141
    %s159 = sphi 0, %s159
    %s161 = sphi 0, %s159
    %s162 = sphi 0, %s161
    %s176 = sphi 0, %s162
    %s182 = sphi 0, %s184
    %s185 = sphi 0, %s182
    %s186 = sphi 0, %s185
    %s202 = sphi 0, %s186
  $region4: #{nas_phy10000_forward.5} parent=0 // loop_header_branch
    %15 = sbr.rel (%p13) target = $region8
  $region5: #{nas_phy10000_forward.5} parent=0 // loop_body
    %s17 = ssub.s32 %s12, 1
    %s18 = ssub.s32 %s12, 2
    %s25 = sadd.s32 1, %s20
    %p26 = scmp.ge.s32.totalorder %s25, 1
    %s27 = scalar_select %p26, 0, %s25
    %s28 = sadd.s32 1, %s19
    %s29 = scalar_select %p26, %s28, %s19
    %p30 = scmp.ge.s32.totalorder %s29, 2
    %s31 = scalar_select %p30, 0, %s29
    %s32 = ssub.s32 %s19, %s31
    %s33 = ssub.s32 %s20, %s27
    %s34 = sor.u32 %s32, %s33
    %p35 = scmp.eq.s32.totalorder %s34, 0
    %s37 = sadd.s32 %s36, 1
    %s38 = scalar_select %p35, %s36, %s37
    %p41 = pneg %p35
    %p42 = scmp.eq.s32.totalorder %s12, 1
    %p43 = por %p41, %p42
    %p44 = scmp.ne.s32.totalorder %s36, %s39
    %p45 = scmp.eq.s32.totalorder %s12, 0
    %p46 = por %p44, %p45
    %p47 = scmp.ne.s32.totalorder %s36, %s39
    %p48 = scmp.eq.s32.totalorder %s17, 1
    %p49 = por %p47, %p48
    %p50 = scmp.ne.s32.totalorder %s39, %s40
    %p51 = scmp.eq.s32.totalorder %s17, 0
    %p52 = por %p50, %p51
    %p53 = scmp.ne.s32.totalorder %s39, %s40
    %p54 = scmp.eq.s32.totalorder %s18, 1
    %p55 = por %p53, %p54
    %p57 = scmp.ne.s32.totalorder %s40, %s56
    %p58 = scmp.eq.s32.totalorder %s18, 0
    %p59 = por %p57, %p58
    %s60 = ssub.s32 %s20, %s27
    %p61 = scmp.eq.s32.totalorder %s60, 0
    %s63 = sadd.s32 %s62, 1
    %s64 = scalar_select %p61, %s62, %s63
    %p67 = pneg %p61
    %p68 = scmp.eq.s32.totalorder %s12, 1
    %p69 = por %p67, %p68
    %p70 = scmp.ne.s32.totalorder %s62, %s65
    %p71 = scmp.eq.s32.totalorder %s12, 0
    %p72 = por %p70, %p71
    %p73 = scmp.ne.s32.totalorder %s62, %s65
    %p74 = scmp.eq.s32.totalorder %s17, 1
    %p75 = por %p73, %p74
    %p76 = scmp.ne.s32.totalorder %s65, %s66
    %p77 = scmp.eq.s32.totalorder %s17, 0
    %p78 = por %p76, %p77
    %p79 = scmp.ne.s32.totalorder %s65, %s66
    %p80 = scmp.eq.s32.totalorder %s18, 1
    %p81 = por %p79, %p80
    %p83 = scmp.ne.s32.totalorder %s66, %s82
    %p84 = scmp.eq.s32.totalorder %s18, 0
    %p85 = por %p83, %p84
    %s86 = ssub.s32 %s19, %s31
    %p87 = scmp.eq.s32.totalorder %s86, 0
    %s89 = sadd.s32 %s88, 1
    %s90 = scalar_select %p87, %s88, %s89
    %p93 = pneg %p87
    %p94 = scmp.eq.s32.totalorder %s12, 1
    %p95 = por %p93, %p94
    %p96 = scmp.ne.s32.totalorder %s88, %s91
    %p97 = scmp.eq.s32.totalorder %s12, 0
    %p98 = por %p96, %p97
    %p99 = scmp.ne.s32.totalorder %s88, %s91
    %p100 = scmp.eq.s32.totalorder %s17, 1
    %p101 = por %p99, %p100
    %p102 = scmp.ne.s32.totalorder %s91, %s92
    %p103 = scmp.eq.s32.totalorder %s17, 0
    %p104 = por %p102, %p103
    %p105 = scmp.ne.s32.totalorder %s91, %s92
    %p106 = scmp.eq.s32.totalorder %s18, 1
    %p107 = por %p105, %p106
    %p109 = scmp.ne.s32.totalorder %s92, %s108
    %p110 = scmp.eq.s32.totalorder %s18, 0
    %p111 = por %p109, %p110
    %s112 = ssub.s32 %s19, %s31
    %p113 = scmp.eq.s32.totalorder %s112, 0
    %s115 = sadd.s32 %s114, 1
    %s116 = scalar_select %p113, %s114, %s115
    %p119 = pneg %p113
    %p120 = scmp.eq.s32.totalorder %s12, 1
    %p121 = por %p119, %p120
    %p122 = scmp.ne.s32.totalorder %s114, %s117
    %p123 = scmp.eq.s32.totalorder %s12, 0
    %p124 = por %p122, %p123
    %p125 = scmp.ne.s32.totalorder %s114, %s117
    %p126 = scmp.eq.s32.totalorder %s17, 1
    %p127 = por %p125, %p126
    %p128 = scmp.ne.s32.totalorder %s117, %s118
    %p129 = scmp.eq.s32.totalorder %s17, 0
    %p130 = por %p128, %p129
    %p131 = scmp.ne.s32.totalorder %s117, %s118
    %p132 = scmp.eq.s32.totalorder %s18, 1
    %p133 = por %p131, %p132
    %p135 = scmp.ne.s32.totalorder %s118, %s134
    %p136 = scmp.eq.s32.totalorder %s18, 0
    %p137 = por %p135, %p136
    %s139 = sadd.s32 %s138, 1
    %p142 = scmp.eq.s32.totalorder %s12, 1
    %p143 = scmp.ne.s32.totalorder %s138, %s140
    %p144 = scmp.eq.s32.totalorder %s12, 0
    %p145 = por %p143, %p144
    %p146 = scmp.ne.s32.totalorder %s138, %s140
    %p147 = scmp.eq.s32.totalorder %s17, 1
    %p148 = por %p146, %p147
    %p149 = scmp.ne.s32.totalorder %s140, %s141
    %p150 = scmp.eq.s32.totalorder %s17, 0
    %p151 = por %p149, %p150
    %p152 = scmp.ne.s32.totalorder %s140, %s141
    %p153 = scmp.eq.s32.totalorder %s18, 1
    %p154 = por %p152, %p153
    %p156 = scmp.ne.s32.totalorder %s141, %s155
    %p157 = scmp.eq.s32.totalorder %s18, 0
    %p158 = por %p156, %p157
    %s160 = sadd.s32 %s159, 1
    %p163 = scmp.eq.s32.totalorder %s12, 1
    %p164 = scmp.ne.s32.totalorder %s159, %s161
    %p165 = scmp.eq.s32.totalorder %s12, 0
    %p166 = por %p164, %p165
    %p167 = scmp.ne.s32.totalorder %s159, %s161
    %p168 = scmp.eq.s32.totalorder %s17, 1
    %p169 = por %p167, %p168
    %p170 = scmp.ne.s32.totalorder %s161, %s162
    %p171 = scmp.eq.s32.totalorder %s17, 0
    %p172 = por %p170, %p171
    %p173 = scmp.ne.s32.totalorder %s161, %s162
    %p174 = scmp.eq.s32.totalorder %s18, 1
    %p175 = por %p173, %p174
    %p177 = scmp.ne.s32.totalorder %s162, %s176
    %p178 = scmp.eq.s32.totalorder %s18, 0
    %p179 = por %p177, %p178
    %s180 = ssub.s32 %s19, %s31
    %p181 = scmp.eq.s32.totalorder %s180, 0
    %s183 = sadd.s32 %s182, 1
    %s184 = scalar_select %p181, %s182, %s183
    %p187 = pneg %p181
    %p188 = scmp.eq.s32.totalorder %s12, 1
    %p189 = por %p187, %p188
    %p190 = scmp.ne.s32.totalorder %s182, %s185
    %p191 = scmp.eq.s32.totalorder %s12, 0
    %p192 = por %p190, %p191
    %p193 = scmp.ne.s32.totalorder %s182, %s185
    %p194 = scmp.eq.s32.totalorder %s17, 1
    %p195 = por %p193, %p194
    %p196 = scmp.ne.s32.totalorder %s185, %s186
    %p197 = scmp.eq.s32.totalorder %s17, 0
    %p198 = por %p196, %p197
    %p199 = scmp.ne.s32.totalorder %s185, %s186
    %p200 = scmp.eq.s32.totalorder %s18, 1
    %p201 = por %p199, %p200
    %p203 = scmp.ne.s32.totalorder %s186, %s202
    %p204 = scmp.eq.s32.totalorder %s18, 0
    %p205 = por %p203, %p204
    %p206 = scmp.le.s32.totalorder 1, %s12
    %p207 = scmp.lt.s32.totalorder %s12, 3
    %p208 = pnand %p206, %p207
    %p209 = pneg %p208
    // Predicated region
    $region9: #{nas_phy10000_forward.5} parent=5 // pred_check
      _
    $region10: #{nas_phy10000_forward.5} parent=5 // pred_check_branch
      %211 = sbr.rel (%p208) target = $region12
    $region11: #{nas_phy10000_forward.5} parent=5 // pred_region
      %s212 = ssub.s32 %s12, 1
      // Predicated region
      $region13: #{nas_phy10000_forward.5} parent=11 // pred_check
        %p213 = pneg %p78
      $region14: #{nas_phy10000_forward.5} parent=11 // pred_check_branch
        %215 = sbr.rel (%p213) target = $region16
      $region15: #{nas_phy10000_forward.5} parent=11 // pred_region
        %s216 = smul.u32 8, %s22
        %p217 = scmp.lt.s32.totalorder %s216, 7
        %s218 = scalar_select %p217, %s216, 7
        %s219 = smul.addr %s218, 4
        %s220 = scalar_lea.vmem %s1, %s219
        %s221 = smul.u32 8, %s22
      $region16: #{nas_phy10000_forward.5} parent=11 // pred_fallthru
        _
      // Predicated region
      $region17: #{nas_phy10000_forward.5} parent=11 // pred_check
        %p222 = pneg %p151
      $region18: #{nas_phy10000_forward.5} parent=11 // pred_check_branch
        %224 = sbr.rel (%p222) target = $region20
      $region19: #{nas_phy10000_forward.5} parent=11 // pred_region
        _
      $region20: #{nas_phy10000_forward.5} parent=11 // pred_fallthru
        _
      // Predicated region
      $region21: #{nas_phy10000_forward.5} parent=11 // pred_check
        %p225 = pneg %p172
      $region22: #{nas_phy10000_forward.5} parent=11 // pred_check_branch
        %227 = sbr.rel (%p225) target = $region24
      $region23: #{nas_phy10000_forward.5} parent=11 // pred_region
        _
      $region24: #{nas_phy10000_forward.5} parent=11 // pred_fallthru
        _
    $region12: #{nas_phy10000_forward.5} parent=5 // pred_fallthru
      _
    %p228 = scmp.lt.s32.totalorder %s12, 2
    // Predicated region
    $region25: #{nas_phy10000_forward.5} parent=5 // pred_check
      %p229 = pneg %p228
    $region26: #{nas_phy10000_forward.5} parent=5 // pred_check_branch
      %231 = sbr.rel (%p229) target = $region28
    $region27: #{nas_phy10000_forward.5} parent=5 // pred_region
      // Predicated region
      $region29: #{nas_phy10000_forward.5} parent=27 // pred_check
        %p232 = pneg %p46
      $region30: #{nas_phy10000_forward.5} parent=27 // pred_check_branch
        %234 = sbr.rel (%p232) target = $region32
      $region31: #{nas_phy10000_forward.5} parent=27 // pred_region
        %p235 = scmp.lt.s32.totalorder %s19, 1
        %s236 = scalar_select %p235, %s19, 1
        %p237 = scmp.lt.s32.totalorder %s20, 0
        %s238 = scalar_select %p237, %s20, 0
        %s239 = sadd.s32 %s238, %s236
        %s240 = smul.addr %s239, 8
        %s241 = scalar_lea.vmem %s0, %s240
      $region32: #{nas_phy10000_forward.5} parent=27 // pred_fallthru
        _
      // Predicated region
      $region33: #{nas_phy10000_forward.5} parent=27 // pred_check
        %p242 = pneg %p98
      $region34: #{nas_phy10000_forward.5} parent=27 // pred_check_branch
        %244 = sbr.rel (%p242) target = $region36
      $region35: #{nas_phy10000_forward.5} parent=27 // pred_region
        %s245 = smul.u32 4, %s19
        %p246 = scmp.lt.s32.totalorder %s245, 7
        %s247 = scalar_select %p246, %s245, 7
        %s248 = smul.addr %s247, 8
        %s249 = scalar_lea.vmem %s2, %s248
        %s250 = smul.u32 4, %s19
      $region36: #{nas_phy10000_forward.5} parent=27 // pred_fallthru
        _
      // Predicated region
      $region37: #{nas_phy10000_forward.5} parent=27 // pred_check
        %p251 = pneg %p124
      $region38: #{nas_phy10000_forward.5} parent=27 // pred_check_branch
        %253 = sbr.rel (%p251) target = $region40
      $region39: #{nas_phy10000_forward.5} parent=27 // pred_region
        %s254 = smul.u32 4, %s19
        %p255 = scmp.lt.s32.totalorder %s254, 7
        %s256 = scalar_select %p255, %s254, 7
        %s257 = smul.addr %s256, 4
        %s258 = scalar_lea.vmem %s3, %s257
        %s259 = smul.u32 4, %s19
      $region40: #{nas_phy10000_forward.5} parent=27 // pred_fallthru
        _
    $region28: #{nas_phy10000_forward.5} parent=5 // pred_fallthru
      _
    %p260 = scmp.le.s32.totalorder 1, %s12
    %p261 = scmp.lt.s32.totalorder %s12, 3
    %p262 = pnand %p260, %p261
    %p263 = pneg %p262
    // Predicated region
    $region41: #{nas_phy10000_forward.5} parent=5 // pred_check
      _
    $region42: #{nas_phy10000_forward.5} parent=5 // pred_check_branch
      %265 = sbr.rel (%p262) target = $region44
    $region43: #{nas_phy10000_forward.5} parent=5 // pred_region
      %s266 = ssub.s32 %s12, 1
      %p267 = scmp.lt.s32.totalorder %s21, 1
      %s268 = scalar_select %p267, %s21, 1
      %p269 = scmp.lt.s32.totalorder %s22, 0
      %s270 = scalar_select %p269, %s22, 0
      %s271 = sadd.s32 %s270, %s268
      %s272 = smul.addr %s271, 8
      %s273 = scalar_lea.vmem %s0, %s272
      %p274 = pneg %p52
      %p275 = pneg %p49
      %s276 = smul.u32 8, %s22
      %p277 = scmp.lt.s32.totalorder %s276, 7
      %s278 = scalar_select %p277, %s276, 7
      %s279 = smul.addr %s278, 4
      %s280 = scalar_lea.vmem %s1, %s279
      %p281 = pneg %p78
      %p282 = pneg %p75
      %s283 = smul.u32 4, %s21
      %p284 = scmp.lt.s32.totalorder %s283, 7
      %s285 = scalar_select %p284, %s283, 7
      %s286 = smul.addr %s285, 8
      %s287 = scalar_lea.vmem %s2, %s286
      %p288 = pneg %p104
      %p289 = pneg %p101
      %s290 = smul.u32 4, %s21
      %p291 = scmp.lt.s32.totalorder %s290, 7
      %s292 = scalar_select %p291, %s290, 7
      %s293 = smul.addr %s292, 4
      %s294 = scalar_lea.vmem %s3, %s293
      %p295 = pneg %p130
      %p296 = pneg %p127
      %p297 = pneg %p151
      %p298 = pneg %p148
      %p299 = pneg %p172
      %p300 = pneg %p169
      %p301 = pneg %p198
      %p302 = pneg %p195
      %s303 = smul.u32 4, %s21
      %p304 = scmp.lt.s32.totalorder %s303, 7
      %s305 = scalar_select %p304, %s303, 7
      %s306 = smul.addr %s305, 8
      %s307 = scalar_lea.vmem %s6, %s306
      %p308 = scmp.lt.s32.totalorder %s21, 1
      %s309 = scalar_select %p308, %s21, 1
      %p310 = scmp.lt.s32.totalorder %s22, 0
      %s311 = scalar_select %p310, %s22, 0
      %s312 = sadd.s32 %s311, %s309
      %s313 = smul.addr %s312, 8
      %s314 = scalar_lea.vmem %s0, %s313
      %s315 = smul.u32 8, %s22
      %p316 = scmp.lt.s32.totalorder %s315, 7
      %s317 = scalar_select %p316, %s315, 7
      %s318 = smul.addr %s317, 4
      %s319 = scalar_lea.vmem %s1, %s318
      %s320 = smul.u32 8, %s22
      %s321 = smul.u32 4, %s21
      %p322 = scmp.lt.s32.totalorder %s321, 7
      %s323 = scalar_select %p322, %s321, 7
      %s324 = smul.addr %s323, 8
      %s325 = scalar_lea.vmem %s2, %s324
      %s326 = smul.u32 4, %s21
      %s327 = smul.u32 4, %s21
      %p328 = scmp.lt.s32.totalorder %s327, 7
      %s329 = scalar_select %p328, %s327, 7
      %s330 = smul.addr %s329, 4
      %s331 = scalar_lea.vmem %s3, %s330
      %s332 = smul.u32 4, %s21
      %s333 = smul.u32 4, %s21
      %p334 = scmp.lt.s32.totalorder %s333, 7
      %s335 = scalar_select %p334, %s333, 7
      %s336 = smul.addr %s335, 8
      %s337 = scalar_lea.vmem %s6, %s336
      %s338 = smul.u32 4, %s21
      %p340 = scmp.eq.s32.totalorder %s22, 0
      // Predicated region
      $region45: #{nas_phy10000_forward.5} parent=43 // pred_check
        %p341 = pneg %p340
      $region46: #{nas_phy10000_forward.5} parent=43 // pred_check_branch
        %343 = sbr.rel (%p341) target = $region48
      $region47: #{nas_phy10000_forward.5} parent=43 // pred_region
        %344 = vst [vmem:[#allocation2] sm:$0xff] 0.0
        %345 = vst [vmem:[#allocation2 + $0x8] sm:$0xff] 0.0
        %346 = vst [vmem:[#allocation2 + $0x10] sm:$0xff] 0.0
        %347 = vst [vmem:[#allocation2 + $0x18] sm:$0xff] 0.0
      $region48: #{nas_phy10000_forward.5} parent=43 // pred_fallthru
        _
      %v348 = vld [vmem:[#allocation2] sm:$0xff]
      %v349 = vld [vmem:[#allocation2 + $0x8] sm:$0xff]
      %v350 = vld [vmem:[#allocation2 + $0x10] sm:$0xff]
      %v351 = vld [vmem:[#allocation2 + $0x18] sm:$0xff]
      %v352 = vld [vmem:[%s314] sm:$0xff]
      %v353 = vunpack.c.0.s8 %v352
      %v354 = vunpack.c.1.s8 %v352
      %v355 = vunpack.c.2.s8 %v352
      %v356 = vunpack.c.3.s8 %v352
      %v357 = vcvt.s32.f32 %v353
      %v358 = vcvt.s32.f32 %v354
      %v359 = vcvt.s32.f32 %v355
      %v360 = vcvt.s32.f32 %v356
      %v361 = vpack.c.bf16 %v358, %v357
      %v362 = vpack.c.bf16 %v360, %v359
      %v363 = vld [vmem:[%s319] sm:$0xf]
      %v364 = vld [vmem:[%s319 + $0x4] sm:$0xf]
      %v365 = vld [vmem:[%s319 + $0x8] sm:$0xf]
      %v366 = vld [vmem:[%s319 + $0xc] sm:$0xf]
      %v367 = vld [vmem:[%s319 + $0x10] sm:$0xf]
      %v368 = vld [vmem:[%s319 + $0x14] sm:$0xf]
      %v369 = vld [vmem:[%s319 + $0x18] sm:$0xf]
      %v370 = vld [vmem:[%s319 + $0x1c] sm:$0xf]
      %v379 = vunpack.c.l.b16 %v363
      %v380 = vunpack.c.l.b16 %v364
      %v381 = vunpack.c.l.b16 %v365
      %v382 = vunpack.c.l.b16 %v366
      %v383 = vunpack.c.l.b16 %v367
      %v384 = vunpack.c.l.b16 %v368
      %v385 = vunpack.c.l.b16 %v369
      %v386 = vunpack.c.l.b16 %v370
      %v387 = vpack.c.b16 %v380, %v379
      %v388 = vpack.c.b16 %v382, %v381
      %v389 = vpack.c.b16 %v384, %v383
      %v390 = vpack.c.b16 %v386, %v385
      %vm395 = vcmask 523264
      %v397 = vsel %vm395, %v361, 0
      %v400 = vsel %vm395, %v362, 0
      %402 = vmatpush.bf16.msra.mxu0 0
      %403 = vmatpush.bf16.msra.mxu0 0
      %404 = vmatpush.bf16.msra.mxu0 0
      %405 = vmatpush.bf16.msra.mxu0 0
      %406 = vmatpush.bf16.msra.mxu0 %v390
      %407 = vmatpush.bf16.msra.mxu0 %v389
      %408 = vmatpush.bf16.msra.mxu0 %v388
      %409 = vmatpush.bf16.msra.mxu0 %v387
      %410 = vmatmul.bf16.gmra.mxu0 %v397
      %v411 = vpop.f32.mrf.mxu0
      %v412 = vadd.f32 0.0, %v411
      %v413 = vpop.f32.mrf.mxu0
      %v414 = vadd.f32 0.0, %v413
      %415 = vmatmul.bf16.gmra.mxu0 %v400
      %v416 = vpop.f32.mrf.mxu0
      %v417 = vadd.f32 0.0, %v416
      %v418 = vpop.f32.mrf.mxu0
      %v419 = vadd.f32 0.0, %v418
      %420 = vdwg.mxu0
      %v421 = vadd.f32 %v348, %v412
      %v422 = vadd.f32 %v349, %v414
      %v423 = vadd.f32 %v350, %v417
      %v424 = vadd.f32 %v351, %v419
      %425 = vst [vmem:[#allocation2] sm:$0xff] %v421
      %426 = vst [vmem:[#allocation2 + $0x8] sm:$0xff] %v422
      %427 = vst [vmem:[#allocation2 + $0x10] sm:$0xff] %v423
      %428 = vst [vmem:[#allocation2 + $0x18] sm:$0xff] %v424
      // Predicated region
      $region49: #{nas_phy10000_forward.5} parent=43 // pred_check
        %p429 = pneg %p340
      $region50: #{nas_phy10000_forward.5} parent=43 // pred_check_branch
        %431 = sbr.rel (%p429) target = $region52
      $region51: #{nas_phy10000_forward.5} parent=43 // pred_region
        %v432 = vld [vmem:[#allocation2] sm:$0xff]
        %v433 = vld [vmem:[#allocation2 + $0x8] sm:$0xff]
        %v434 = vld [vmem:[#allocation2 + $0x10] sm:$0xff]
        %v435 = vld [vmem:[#allocation2 + $0x18] sm:$0xff]
        %v436 = vld [vmem:[%s325] sm:$0xff]
        %v437 = vld [vmem:[%s325 + $0x8] sm:$0xff]
        %v438 = vld [vmem:[%s325 + $0x10] sm:$0xff]
        %v439 = vld [vmem:[%s325 + $0x18] sm:$0xff]
        %441 = vset.pattern.permute.xlu0 0
        %442 = vperm.xlu0 %441, %v436
        %v443 = vpop.permute.xlu0 %442
        %446 = vset.pattern.permute.xlu0 0
        %447 = vperm.xlu0 %446, %v437
        %v448 = vpop.permute.xlu0 %447
        %451 = vset.pattern.permute.xlu0 0
        %452 = vperm.xlu0 %451, %v438
        %v453 = vpop.permute.xlu0 %452
        %456 = vset.pattern.permute.xlu0 0
        %457 = vperm.xlu0 %456, %v439
        %v458 = vpop.permute.xlu0 %457
        %v460 = vmul.f32 %v432, %v443
        %v461 = vmul.f32 %v433, %v448
        %v462 = vmul.f32 %v434, %v453
        %v463 = vmul.f32 %v435, %v458
        %v464 = vld [vmem:[%s331] sm:$0xf]
        %v465 = vld [vmem:[%s331 + $0x4] sm:$0xf]
        %v466 = vld [vmem:[%s331 + $0x8] sm:$0xf]
        %v467 = vld [vmem:[%s331 + $0xc] sm:$0xf]
        %v468 = vunpack.c.l.bf16 %v464
        %v469 = vunpack.c.l.bf16 %v465
        %v470 = vunpack.c.l.bf16 %v466
        %v471 = vunpack.c.l.bf16 %v467
        %v472 = vld [vmem:[%s4] sm:$0xff]
        %v473 = vld [vmem:[%s4 + $0x8] sm:$0xff]
        %v474 = vld [vmem:[%s4 + $0x10] sm:$0xff]
        %v475 = vld [vmem:[%s4 + $0x18] sm:$0xff]
        %v476 = vld [vmem:[%s4 + $0x20] sm:$0xff]
        %v477 = vld [vmem:[%s4 + $0x28] sm:$0xff]
        %v478 = vld [vmem:[%s4 + $0x30] sm:$0xff]
        %v479 = vld [vmem:[%s4 + $0x38] sm:$0xff]
        %v480 = vld [vmem:[%s4 + $0x40] sm:$0xff]
        %v481 = vld [vmem:[%s4 + $0x48] sm:$0xff]
        %v482 = vld [vmem:[%s4 + $0x50] sm:$0xff]
        %v483 = vld [vmem:[%s4 + $0x58] sm:$0xff]
        %v484 = vld [vmem:[%s4 + $0x60] sm:$0xff]
        %v485 = vld [vmem:[%s4 + $0x68] sm:$0xff]
        %v486 = vld [vmem:[%s4 + $0x70] sm:$0xff]
        %v487 = vld [vmem:[%s4 + $0x78] sm:$0xff]
        %v488 = vld [vmem:[%s5] sm:$0x1]
        %v490 = vperm.slane %v488, 0
        %492 = vmatpush.msra.mxu0 %v487
        %493 = vmatpush.msra.mxu0 %v486
        %494 = vmatpush.msra.mxu0 %v485
        %495 = vmatpush.msra.mxu0 %v484
        %496 = vmatpush.msra.mxu0 %v483
        %497 = vmatpush.msra.mxu0 %v482
        %498 = vmatpush.msra.mxu0 %v481
        %499 = vmatpush.msra.mxu0 %v480
        %500 = vmatpush.msra.mxu0 %v479
        %501 = vmatpush.msra.mxu0 %v478
        %502 = vmatpush.msra.mxu0 %v477
        %503 = vmatpush.msra.mxu0 %v476
        %504 = vmatpush.msra.mxu0 %v475
        %505 = vmatpush.msra.mxu0 %v474
        %506 = vmatpush.msra.mxu0 %v473
        %507 = vmatpush.msra.mxu0 %v472
        %508 = vmatmul.f32.gmra.mxu0 %v468
        %v509 = vpop.f32.mrf.mxu0
        %v510 = vadd.f32 %v490, %v509
        %511 = vmatmul.f32.gmra.mxu0 %v469
        %v512 = vpop.f32.mrf.mxu0
        %v513 = vadd.f32 %v490, %v512
        %514 = vmatmul.f32.gmra.mxu0 %v470
        %v515 = vpop.f32.mrf.mxu0
        %v516 = vadd.f32 %v490, %v515
        %517 = vmatmul.f32.gmra.mxu0 %v471
        %v518 = vpop.f32.mrf.mxu0
        %v519 = vadd.f32 %v490, %v518
        %520 = vdwg.mxu0
        %v521 = vadd.f32 %v460, %v510
        %v522 = vadd.f32 %v461, %v513
        %v523 = vadd.f32 %v462, %v516
        %v524 = vadd.f32 %v463, %v519
        %v525 = vmax.f32 %v521, 0.0
        %v526 = vmax.f32 %v522, 0.0
        %v527 = vmax.f32 %v523, 0.0
        %v528 = vmax.f32 %v524, 0.0
        %v529 = vadd.f32 %v468, %v525
        %v530 = vadd.f32 %v469, %v526
        %v531 = vadd.f32 %v470, %v527
        %v532 = vadd.f32 %v471, %v528
        %v533 = vtanh.pop %v529
        %v534 = vtanh.pop %v530
        %v535 = vtanh.pop %v531
        %v536 = vtanh.pop %v532
        %537 = vst [vmem:[%s337] sm:$0xff] %v533
        %538 = vst [vmem:[%s337 + $0x8] sm:$0xff] %v534
        %539 = vst [vmem:[%s337 + $0x10] sm:$0xff] %v535
        %540 = vst [vmem:[%s337 + $0x18] sm:$0xff] %v536
      $region52: #{nas_phy10000_forward.5} parent=43 // pred_fallthru
        _
      %s541 = smul.u32 4, %s21
      %p542 = scmp.lt.s32.totalorder %s541, 7
      %s543 = scalar_select %p542, %s541, 7
      %s544 = smul.addr %s543, 8
      %s545 = scalar_lea.vmem %s6, %s544
      // Predicated region
      $region53: #{nas_phy10000_forward.5} parent=43 // pred_check
        %p546 = pneg %p195
      $region54: #{nas_phy10000_forward.5} parent=43 // pred_check_branch
        %548 = sbr.rel (%p546) target = $region56
      $region55: #{nas_phy10000_forward.5} parent=43 // pred_region
        %s549 = smul.u32 4, %s21
      $region56: #{nas_phy10000_forward.5} parent=43 // pred_fallthru
        _
    $region44: #{nas_phy10000_forward.5} parent=5 // pred_fallthru
      _
    %p550 = scmp.le.s32.totalorder 2, %s12
    // Predicated region
    $region57: #{nas_phy10000_forward.5} parent=5 // pred_check
      %p551 = pneg %p550
    $region58: #{nas_phy10000_forward.5} parent=5 // pred_check_branch
      %553 = sbr.rel (%p551) target = $region60
    $region59: #{nas_phy10000_forward.5} parent=5 // pred_region
      %s554 = ssub.s32 %s12, 2
      // Predicated region
      $region61: #{nas_phy10000_forward.5} parent=59 // pred_check
        %p555 = pneg %p201
      $region62: #{nas_phy10000_forward.5} parent=59 // pred_check_branch
        %557 = sbr.rel (%p555) target = $region64
      $region63: #{nas_phy10000_forward.5} parent=59 // pred_region
        %s558 = smul.u32 4, %s23
        %p559 = scmp.lt.s32.totalorder %s558, 7
        %s560 = scalar_select %p559, %s558, 7
        %s561 = smul.addr %s560, 8
        %s562 = scalar_lea.vmem %s6, %s561
      $region64: #{nas_phy10000_forward.5} parent=59 // pred_fallthru
        _
    $region60: #{nas_phy10000_forward.5} parent=5 // pred_fallthru
      _
  $region6: #{nas_phy10000_forward.5} parent=0 // loop_footer
    %s16 = sadd.s32 1, %s12
  $region7: #{nas_phy10000_forward.5} parent=0 // loop_footer_branch
    %11 = sbr.rel target = $region3
  $region8: #{nas_phy10000_forward.5} parent=0 // loop_exit
    _

// kernel: nas_phy10000_forward.7
$region0: #{nas_phy10000_forward.7}
  #allocation0 [shape = 'u32[]', space=smem, size = 0x4, offset = 0x4, fixed_abs, tag = 'smem constant byte address 0x4 - core index']
  #allocation1 [shape = 'u32[72,128]{1,0:T(1,128)}', space=vmem, size = 0x9000, scoped, tag = 'internal scratch']
  #allocation2 [shape = 'f32[32,128]{1,0:T(8,128)}', space=vmem, size = 0x4000, scoped, tag = 'scratch operand']
  %s0 = inlined_call_operand.vmem [shape: s8[64,64], index: 0, kind: input, shape index: {}]
  %s1 = inlined_call_operand.vmem [shape: bf16[64,128], index: 1, kind: input, shape index: {}]
  %s2 = inlined_call_operand.vmem [shape: f32[64,1], index: 2, kind: input, shape index: {}]
  %s3 = inlined_call_operand.vmem [shape: bf16[64,128], index: 3, kind: input, shape index: {}]
  %s4 = inlined_call_operand.vmem [shape: f32[128,128], index: 4, kind: input, shape index: {}]
  %s5 = inlined_call_operand.vmem [shape: f32[1,128], index: 5, kind: input, shape index: {}]
  %s6 = inlined_call_operand.vmem [shape: f32[128,128], index: 6, kind: input, shape index: {}]
  %s7 = inlined_call_operand.vmem [shape: f32[1,128], index: 7, kind: input, shape index: {}]
  %s8 = inlined_call_operand.vmem [shape: f32[64,128], index: 8, kind: output, shape index: {}]
  %s9 = sld [smem:[#allocation0]]
  $region73: #{nas_phy10000_forward.7} parent=0
    _
  %s11 = ssub.s32 1, %s9
  %s12 = scalar_select 0, %s11, %s9
  loop: start=0, step=1, limit=4
  $region2: #{nas_phy10000_forward.7} parent=0 // loop_pre_header
    _
  $region3: #{nas_phy10000_forward.7} parent=0 // loop_header
    %s14 = sphi 0, %s18
    %p15 = scmp.ge.s32.totalorder %s14, 4
    %s21 = sphi 0, %s33
    %s22 = sphi 0, %s29
    %s23 = sphi 0, %s21
    %s24 = sphi 0, %s22
    %s25 = sphi 0, %s23
    %s26 = sphi 0, %s24
    %s38 = sphi 0, %s40
    %s41 = sphi 0, %s38
    %s42 = sphi 0, %s41
    %s58 = sphi 0, %s42
    %s64 = sphi 0, %s66
    %s67 = sphi 0, %s64
    %s68 = sphi 0, %s67
    %s84 = sphi 0, %s68
    %s90 = sphi 0, %s92
    %s93 = sphi 0, %s90
    %s94 = sphi 0, %s93
    %s110 = sphi 0, %s94
    %s116 = sphi 0, %s118
    %s119 = sphi 0, %s116
    %s120 = sphi 0, %s119
    %s136 = sphi 0, %s120
    %s140 = sphi 0, %s140
    %s142 = sphi 0, %s140
    %s143 = sphi 0, %s142
    %s157 = sphi 0, %s143
    %s161 = sphi 0, %s161
    %s163 = sphi 0, %s161
    %s164 = sphi 0, %s163
    %s178 = sphi 0, %s164
    %s182 = sphi 0, %s182
    %s184 = sphi 0, %s182
    %s185 = sphi 0, %s184
    %s199 = sphi 0, %s185
    %s203 = sphi 0, %s203
    %s205 = sphi 0, %s203
    %s206 = sphi 0, %s205
    %s220 = sphi 0, %s206
    %s226 = sphi 0, %s228
    %s229 = sphi 0, %s226
    %s230 = sphi 0, %s229
    %s246 = sphi 0, %s230
  $region4: #{nas_phy10000_forward.7} parent=0 // loop_header_branch
    %17 = sbr.rel (%p15) target = $region8
  $region5: #{nas_phy10000_forward.7} parent=0 // loop_body
    %s19 = ssub.s32 %s14, 1
    %s20 = ssub.s32 %s14, 2
    %s27 = sadd.s32 1, %s22
    %p28 = scmp.ge.s32.totalorder %s27, 1
    %s29 = scalar_select %p28, 0, %s27
    %s30 = sadd.s32 1, %s21
    %s31 = scalar_select %p28, %s30, %s21
    %p32 = scmp.ge.s32.totalorder %s31, 2
    %s33 = scalar_select %p32, 0, %s31
    %s34 = ssub.s32 %s21, %s33
    %s35 = ssub.s32 %s22, %s29
    %s36 = sor.u32 %s34, %s35
    %p37 = scmp.eq.s32.totalorder %s36, 0
    %s39 = sadd.s32 %s38, 1
    %s40 = scalar_select %p37, %s38, %s39
    %p43 = pneg %p37
    %p44 = scmp.eq.s32.totalorder %s14, 1
    %p45 = por %p43, %p44
    %p46 = scmp.ne.s32.totalorder %s38, %s41
    %p47 = scmp.eq.s32.totalorder %s14, 0
    %p48 = por %p46, %p47
    %p49 = scmp.ne.s32.totalorder %s38, %s41
    %p50 = scmp.eq.s32.totalorder %s19, 1
    %p51 = por %p49, %p50
    %p52 = scmp.ne.s32.totalorder %s41, %s42
    %p53 = scmp.eq.s32.totalorder %s19, 0
    %p54 = por %p52, %p53
    %p55 = scmp.ne.s32.totalorder %s41, %s42
    %p56 = scmp.eq.s32.totalorder %s20, 1
    %p57 = por %p55, %p56
    %p59 = scmp.ne.s32.totalorder %s42, %s58
    %p60 = scmp.eq.s32.totalorder %s20, 0
    %p61 = por %p59, %p60
    %s62 = ssub.s32 %s22, %s29
    %p63 = scmp.eq.s32.totalorder %s62, 0
    %s65 = sadd.s32 %s64, 1
    %s66 = scalar_select %p63, %s64, %s65
    %p69 = pneg %p63
    %p70 = scmp.eq.s32.totalorder %s14, 1
    %p71 = por %p69, %p70
    %p72 = scmp.ne.s32.totalorder %s64, %s67
    %p73 = scmp.eq.s32.totalorder %s14, 0
    %p74 = por %p72, %p73
    %p75 = scmp.ne.s32.totalorder %s64, %s67
    %p76 = scmp.eq.s32.totalorder %s19, 1
    %p77 = por %p75, %p76
    %p78 = scmp.ne.s32.totalorder %s67, %s68
    %p79 = scmp.eq.s32.totalorder %s19, 0
    %p80 = por %p78, %p79
    %p81 = scmp.ne.s32.totalorder %s67, %s68
    %p82 = scmp.eq.s32.totalorder %s20, 1
    %p83 = por %p81, %p82
    %p85 = scmp.ne.s32.totalorder %s68, %s84
    %p86 = scmp.eq.s32.totalorder %s20, 0
    %p87 = por %p85, %p86
    %s88 = ssub.s32 %s21, %s33
    %p89 = scmp.eq.s32.totalorder %s88, 0
    %s91 = sadd.s32 %s90, 1
    %s92 = scalar_select %p89, %s90, %s91
    %p95 = pneg %p89
    %p96 = scmp.eq.s32.totalorder %s14, 1
    %p97 = por %p95, %p96
    %p98 = scmp.ne.s32.totalorder %s90, %s93
    %p99 = scmp.eq.s32.totalorder %s14, 0
    %p100 = por %p98, %p99
    %p101 = scmp.ne.s32.totalorder %s90, %s93
    %p102 = scmp.eq.s32.totalorder %s19, 1
    %p103 = por %p101, %p102
    %p104 = scmp.ne.s32.totalorder %s93, %s94
    %p105 = scmp.eq.s32.totalorder %s19, 0
    %p106 = por %p104, %p105
    %p107 = scmp.ne.s32.totalorder %s93, %s94
    %p108 = scmp.eq.s32.totalorder %s20, 1
    %p109 = por %p107, %p108
    %p111 = scmp.ne.s32.totalorder %s94, %s110
    %p112 = scmp.eq.s32.totalorder %s20, 0
    %p113 = por %p111, %p112
    %s114 = ssub.s32 %s21, %s33
    %p115 = scmp.eq.s32.totalorder %s114, 0
    %s117 = sadd.s32 %s116, 1
    %s118 = scalar_select %p115, %s116, %s117
    %p121 = pneg %p115
    %p122 = scmp.eq.s32.totalorder %s14, 1
    %p123 = por %p121, %p122
    %p124 = scmp.ne.s32.totalorder %s116, %s119
    %p125 = scmp.eq.s32.totalorder %s14, 0
    %p126 = por %p124, %p125
    %p127 = scmp.ne.s32.totalorder %s116, %s119
    %p128 = scmp.eq.s32.totalorder %s19, 1
    %p129 = por %p127, %p128
    %p130 = scmp.ne.s32.totalorder %s119, %s120
    %p131 = scmp.eq.s32.totalorder %s19, 0
    %p132 = por %p130, %p131
    %p133 = scmp.ne.s32.totalorder %s119, %s120
    %p134 = scmp.eq.s32.totalorder %s20, 1
    %p135 = por %p133, %p134
    %p137 = scmp.ne.s32.totalorder %s120, %s136
    %p138 = scmp.eq.s32.totalorder %s20, 0
    %p139 = por %p137, %p138
    %s141 = sadd.s32 %s140, 1
    %p144 = scmp.eq.s32.totalorder %s14, 1
    %p145 = scmp.ne.s32.totalorder %s140, %s142
    %p146 = scmp.eq.s32.totalorder %s14, 0
    %p147 = por %p145, %p146
    %p148 = scmp.ne.s32.totalorder %s140, %s142
    %p149 = scmp.eq.s32.totalorder %s19, 1
    %p150 = por %p148, %p149
    %p151 = scmp.ne.s32.totalorder %s142, %s143
    %p152 = scmp.eq.s32.totalorder %s19, 0
    %p153 = por %p151, %p152
    %p154 = scmp.ne.s32.totalorder %s142, %s143
    %p155 = scmp.eq.s32.totalorder %s20, 1
    %p156 = por %p154, %p155
    %p158 = scmp.ne.s32.totalorder %s143, %s157
    %p159 = scmp.eq.s32.totalorder %s20, 0
    %p160 = por %p158, %p159
    %s162 = sadd.s32 %s161, 1
    %p165 = scmp.eq.s32.totalorder %s14, 1
    %p166 = scmp.ne.s32.totalorder %s161, %s163
    %p167 = scmp.eq.s32.totalorder %s14, 0
    %p168 = por %p166, %p167
    %p169 = scmp.ne.s32.totalorder %s161, %s163
    %p170 = scmp.eq.s32.totalorder %s19, 1
    %p171 = por %p169, %p170
    %p172 = scmp.ne.s32.totalorder %s163, %s164
    %p173 = scmp.eq.s32.totalorder %s19, 0
    %p174 = por %p172, %p173
    %p175 = scmp.ne.s32.totalorder %s163, %s164
    %p176 = scmp.eq.s32.totalorder %s20, 1
    %p177 = por %p175, %p176
    %p179 = scmp.ne.s32.totalorder %s164, %s178
    %p180 = scmp.eq.s32.totalorder %s20, 0
    %p181 = por %p179, %p180
    %s183 = sadd.s32 %s182, 1
    %p186 = scmp.eq.s32.totalorder %s14, 1
    %p187 = scmp.ne.s32.totalorder %s182, %s184
    %p188 = scmp.eq.s32.totalorder %s14, 0
    %p189 = por %p187, %p188
    %p190 = scmp.ne.s32.totalorder %s182, %s184
    %p191 = scmp.eq.s32.totalorder %s19, 1
    %p192 = por %p190, %p191
    %p193 = scmp.ne.s32.totalorder %s184, %s185
    %p194 = scmp.eq.s32.totalorder %s19, 0
    %p195 = por %p193, %p194
    %p196 = scmp.ne.s32.totalorder %s184, %s185
    %p197 = scmp.eq.s32.totalorder %s20, 1
    %p198 = por %p196, %p197
    %p200 = scmp.ne.s32.totalorder %s185, %s199
    %p201 = scmp.eq.s32.totalorder %s20, 0
    %p202 = por %p200, %p201
    %s204 = sadd.s32 %s203, 1
    %p207 = scmp.eq.s32.totalorder %s14, 1
    %p208 = scmp.ne.s32.totalorder %s203, %s205
    %p209 = scmp.eq.s32.totalorder %s14, 0
    %p210 = por %p208, %p209
    %p211 = scmp.ne.s32.totalorder %s203, %s205
    %p212 = scmp.eq.s32.totalorder %s19, 1
    %p213 = por %p211, %p212
    %p214 = scmp.ne.s32.totalorder %s205, %s206
    %p215 = scmp.eq.s32.totalorder %s19, 0
    %p216 = por %p214, %p215
    %p217 = scmp.ne.s32.totalorder %s205, %s206
    %p218 = scmp.eq.s32.totalorder %s20, 1
    %p219 = por %p217, %p218
    %p221 = scmp.ne.s32.totalorder %s206, %s220
    %p222 = scmp.eq.s32.totalorder %s20, 0
    %p223 = por %p221, %p222
    %s224 = ssub.s32 %s21, %s33
    %p225 = scmp.eq.s32.totalorder %s224, 0
    %s227 = sadd.s32 %s226, 1
    %s228 = scalar_select %p225, %s226, %s227
    %p231 = pneg %p225
    %p232 = scmp.eq.s32.totalorder %s14, 1
    %p233 = por %p231, %p232
    %p234 = scmp.ne.s32.totalorder %s226, %s229
    %p235 = scmp.eq.s32.totalorder %s14, 0
    %p236 = por %p234, %p235
    %p237 = scmp.ne.s32.totalorder %s226, %s229
    %p238 = scmp.eq.s32.totalorder %s19, 1
    %p239 = por %p237, %p238
    %p240 = scmp.ne.s32.totalorder %s229, %s230
    %p241 = scmp.eq.s32.totalorder %s19, 0
    %p242 = por %p240, %p241
    %p243 = scmp.ne.s32.totalorder %s229, %s230
    %p244 = scmp.eq.s32.totalorder %s20, 1
    %p245 = por %p243, %p244
    %p247 = scmp.ne.s32.totalorder %s230, %s246
    %p248 = scmp.eq.s32.totalorder %s20, 0
    %p249 = por %p247, %p248
    %p250 = scmp.le.s32.totalorder 1, %s14
    %p251 = scmp.lt.s32.totalorder %s14, 3
    %p252 = pnand %p250, %p251
    %p253 = pneg %p252
    // Predicated region
    $region9: #{nas_phy10000_forward.7} parent=5 // pred_check
      _
    $region10: #{nas_phy10000_forward.7} parent=5 // pred_check_branch
      %255 = sbr.rel (%p252) target = $region12
    $region11: #{nas_phy10000_forward.7} parent=5 // pred_region
      %s256 = ssub.s32 %s14, 1
      // Predicated region
      $region13: #{nas_phy10000_forward.7} parent=11 // pred_check
        %p257 = pneg %p80
      $region14: #{nas_phy10000_forward.7} parent=11 // pred_check_branch
        %259 = sbr.rel (%p257) target = $region16
      $region15: #{nas_phy10000_forward.7} parent=11 // pred_region
        %s260 = smul.u32 8, %s24
        %p261 = scmp.lt.s32.totalorder %s260, 7
        %s262 = scalar_select %p261, %s260, 7
        %s263 = smul.addr %s262, 4
        %s264 = scalar_lea.vmem %s1, %s263
        %s265 = smul.u32 8, %s24
      $region16: #{nas_phy10000_forward.7} parent=11 // pred_fallthru
        _
      // Predicated region
      $region17: #{nas_phy10000_forward.7} parent=11 // pred_check
        %p266 = pneg %p153
      $region18: #{nas_phy10000_forward.7} parent=11 // pred_check_branch
        %268 = sbr.rel (%p266) target = $region20
      $region19: #{nas_phy10000_forward.7} parent=11 // pred_region
        _
      $region20: #{nas_phy10000_forward.7} parent=11 // pred_fallthru
        _
      // Predicated region
      $region21: #{nas_phy10000_forward.7} parent=11 // pred_check
        %p269 = pneg %p174
      $region22: #{nas_phy10000_forward.7} parent=11 // pred_check_branch
        %271 = sbr.rel (%p269) target = $region24
      $region23: #{nas_phy10000_forward.7} parent=11 // pred_region
        _
      $region24: #{nas_phy10000_forward.7} parent=11 // pred_fallthru
        _
      // Predicated region
      $region25: #{nas_phy10000_forward.7} parent=11 // pred_check
        %p272 = pneg %p195
      $region26: #{nas_phy10000_forward.7} parent=11 // pred_check_branch
        %274 = sbr.rel (%p272) target = $region28
      $region27: #{nas_phy10000_forward.7} parent=11 // pred_region
        _
      $region28: #{nas_phy10000_forward.7} parent=11 // pred_fallthru
        _
      // Predicated region
      $region29: #{nas_phy10000_forward.7} parent=11 // pred_check
        %p275 = pneg %p216
      $region30: #{nas_phy10000_forward.7} parent=11 // pred_check_branch
        %277 = sbr.rel (%p275) target = $region32
      $region31: #{nas_phy10000_forward.7} parent=11 // pred_region
        _
      $region32: #{nas_phy10000_forward.7} parent=11 // pred_fallthru
        _
    $region12: #{nas_phy10000_forward.7} parent=5 // pred_fallthru
      _
    %p278 = scmp.lt.s32.totalorder %s14, 2
    // Predicated region
    $region33: #{nas_phy10000_forward.7} parent=5 // pred_check
      %p279 = pneg %p278
    $region34: #{nas_phy10000_forward.7} parent=5 // pred_check_branch
      %281 = sbr.rel (%p279) target = $region36
    $region35: #{nas_phy10000_forward.7} parent=5 // pred_region
      // Predicated region
      $region37: #{nas_phy10000_forward.7} parent=35 // pred_check
        %p282 = pneg %p48
      $region38: #{nas_phy10000_forward.7} parent=35 // pred_check_branch
        %284 = sbr.rel (%p282) target = $region40
      $region39: #{nas_phy10000_forward.7} parent=35 // pred_region
        %p285 = scmp.lt.s32.totalorder %s21, 1
        %s286 = scalar_select %p285, %s21, 1
        %p287 = scmp.lt.s32.totalorder %s22, 0
        %s288 = scalar_select %p287, %s22, 0
        %s289 = sadd.s32 %s288, %s286
        %s290 = smul.addr %s289, 8
        %s291 = scalar_lea.vmem %s0, %s290
      $region40: #{nas_phy10000_forward.7} parent=35 // pred_fallthru
        _
      // Predicated region
      $region41: #{nas_phy10000_forward.7} parent=35 // pred_check
        %p292 = pneg %p100
      $region42: #{nas_phy10000_forward.7} parent=35 // pred_check_branch
        %294 = sbr.rel (%p292) target = $region44
      $region43: #{nas_phy10000_forward.7} parent=35 // pred_region
        %s295 = smul.u32 4, %s21
        %p296 = scmp.lt.s32.totalorder %s295, 7
        %s297 = scalar_select %p296, %s295, 7
        %s298 = smul.addr %s297, 8
        %s299 = scalar_lea.vmem %s2, %s298
        %s300 = smul.u32 4, %s21
      $region44: #{nas_phy10000_forward.7} parent=35 // pred_fallthru
        _
      // Predicated region
      $region45: #{nas_phy10000_forward.7} parent=35 // pred_check
        %p301 = pneg %p126
      $region46: #{nas_phy10000_forward.7} parent=35 // pred_check_branch
        %303 = sbr.rel (%p301) target = $region48
      $region47: #{nas_phy10000_forward.7} parent=35 // pred_region
        %s304 = smul.u32 4, %s21
        %p305 = scmp.lt.s32.totalorder %s304, 7
        %s306 = scalar_select %p305, %s304, 7
        %s307 = smul.addr %s306, 4
        %s308 = scalar_lea.vmem %s3, %s307
        %s309 = smul.u32 4, %s21
      $region48: #{nas_phy10000_forward.7} parent=35 // pred_fallthru
        _
    $region36: #{nas_phy10000_forward.7} parent=5 // pred_fallthru
      _
    %p310 = scmp.le.s32.totalorder 1, %s14
    %p311 = scmp.lt.s32.totalorder %s14, 3
    %p312 = pnand %p310, %p311
    %p313 = pneg %p312
    // Predicated region
    $region49: #{nas_phy10000_forward.7} parent=5 // pred_check
      _
    $region50: #{nas_phy10000_forward.7} parent=5 // pred_check_branch
      %315 = sbr.rel (%p312) target = $region52
    $region51: #{nas_phy10000_forward.7} parent=5 // pred_region
      %s316 = ssub.s32 %s14, 1
      %p317 = scmp.lt.s32.totalorder %s23, 1
      %s318 = scalar_select %p317, %s23, 1
      %p319 = scmp.lt.s32.totalorder %s24, 0
      %s320 = scalar_select %p319, %s24, 0
      %s321 = sadd.s32 %s320, %s318
      %s322 = smul.addr %s321, 8
      %s323 = scalar_lea.vmem %s0, %s322
      %p324 = pneg %p54
      %p325 = pneg %p51
      %s326 = smul.u32 8, %s24
      %p327 = scmp.lt.s32.totalorder %s326, 7
      %s328 = scalar_select %p327, %s326, 7
      %s329 = smul.addr %s328, 4
      %s330 = scalar_lea.vmem %s1, %s329
      %p331 = pneg %p80
      %p332 = pneg %p77
      %s333 = smul.u32 4, %s23
      %p334 = scmp.lt.s32.totalorder %s333, 7
      %s335 = scalar_select %p334, %s333, 7
      %s336 = smul.addr %s335, 8
      %s337 = scalar_lea.vmem %s2, %s336
      %p338 = pneg %p106
      %p339 = pneg %p103
      %s340 = smul.u32 4, %s23
      %p341 = scmp.lt.s32.totalorder %s340, 7
      %s342 = scalar_select %p341, %s340, 7
      %s343 = smul.addr %s342, 4
      %s344 = scalar_lea.vmem %s3, %s343
      %p345 = pneg %p132
      %p346 = pneg %p129
      %p347 = pneg %p153
      %p348 = pneg %p150
      %p349 = pneg %p174
      %p350 = pneg %p171
      %p351 = pneg %p195
      %p352 = pneg %p192
      %p353 = pneg %p216
      %p354 = pneg %p213
      %p355 = pneg %p242
      %p356 = pneg %p239
      %s357 = smul.u32 4, %s23
      %p358 = scmp.lt.s32.totalorder %s357, 7
      %s359 = scalar_select %p358, %s357, 7
      %s360 = smul.addr %s359, 8
      %s361 = scalar_lea.vmem %s8, %s360
      %p362 = scmp.lt.s32.totalorder %s23, 1
      %s363 = scalar_select %p362, %s23, 1
      %p364 = scmp.lt.s32.totalorder %s24, 0
      %s365 = scalar_select %p364, %s24, 0
      %s366 = sadd.s32 %s365, %s363
      %s367 = smul.addr %s366, 8
      %s368 = scalar_lea.vmem %s0, %s367
      %s369 = smul.u32 8, %s24
      %p370 = scmp.lt.s32.totalorder %s369, 7
      %s371 = scalar_select %p370, %s369, 7
      %s372 = smul.addr %s371, 4
      %s373 = scalar_lea.vmem %s1, %s372
      %s374 = smul.u32 8, %s24
      %s375 = smul.u32 4, %s23
      %p376 = scmp.lt.s32.totalorder %s375, 7
      %s377 = scalar_select %p376, %s375, 7
      %s378 = smul.addr %s377, 8
      %s379 = scalar_lea.vmem %s2, %s378
      %s380 = smul.u32 4, %s23
      %s381 = smul.u32 4, %s23
      %p382 = scmp.lt.s32.totalorder %s381, 7
      %s383 = scalar_select %p382, %s381, 7
      %s384 = smul.addr %s383, 4
      %s385 = scalar_lea.vmem %s3, %s384
      %s386 = smul.u32 4, %s23
      %s387 = smul.u32 4, %s23
      %p388 = scmp.lt.s32.totalorder %s387, 7
      %s389 = scalar_select %p388, %s387, 7
      %s390 = smul.addr %s389, 8
      %s391 = scalar_lea.vmem %s8, %s390
      %s392 = smul.u32 4, %s23
      %p394 = scmp.eq.s32.totalorder %s24, 0
      // Predicated region
      $region53: #{nas_phy10000_forward.7} parent=51 // pred_check
        %p395 = pneg %p394
      $region54: #{nas_phy10000_forward.7} parent=51 // pred_check_branch
        %397 = sbr.rel (%p395) target = $region56
      $region55: #{nas_phy10000_forward.7} parent=51 // pred_region
        %398 = vst [vmem:[#allocation2] sm:$0xff] 0.0
        %399 = vst [vmem:[#allocation2 + $0x8] sm:$0xff] 0.0
        %400 = vst [vmem:[#allocation2 + $0x10] sm:$0xff] 0.0
        %401 = vst [vmem:[#allocation2 + $0x18] sm:$0xff] 0.0
      $region56: #{nas_phy10000_forward.7} parent=51 // pred_fallthru
        _
      %v402 = vld [vmem:[#allocation2] sm:$0xff]
      %v403 = vld [vmem:[#allocation2 + $0x8] sm:$0xff]
      %v404 = vld [vmem:[#allocation2 + $0x10] sm:$0xff]
      %v405 = vld [vmem:[#allocation2 + $0x18] sm:$0xff]
      %v406 = vld [vmem:[%s368] sm:$0xff]
      %v407 = vunpack.c.0.s8 %v406
      %v408 = vunpack.c.1.s8 %v406
      %v409 = vunpack.c.2.s8 %v406
      %v410 = vunpack.c.3.s8 %v406
      %v411 = vcvt.s32.f32 %v407
      %v412 = vcvt.s32.f32 %v408
      %v413 = vcvt.s32.f32 %v409
      %v414 = vcvt.s32.f32 %v410
      %v415 = vpack.c.bf16 %v412, %v411
      %v416 = vpack.c.bf16 %v414, %v413
      %v417 = vld [vmem:[%s373] sm:$0xf]
      %v418 = vld [vmem:[%s373 + $0x4] sm:$0xf]
      %v419 = vld [vmem:[%s373 + $0x8] sm:$0xf]
      %v420 = vld [vmem:[%s373 + $0xc] sm:$0xf]
      %v421 = vld [vmem:[%s373 + $0x10] sm:$0xf]
      %v422 = vld [vmem:[%s373 + $0x14] sm:$0xf]
      %v423 = vld [vmem:[%s373 + $0x18] sm:$0xf]
      %v424 = vld [vmem:[%s373 + $0x1c] sm:$0xf]
      %v433 = vunpack.c.l.b16 %v417
      %v434 = vunpack.c.l.b16 %v418
      %v435 = vunpack.c.l.b16 %v419
      %v436 = vunpack.c.l.b16 %v420
      %v437 = vunpack.c.l.b16 %v421
      %v438 = vunpack.c.l.b16 %v422
      %v439 = vunpack.c.l.b16 %v423
      %v440 = vunpack.c.l.b16 %v424
      %v441 = vpack.c.b16 %v434, %v433
      %v442 = vpack.c.b16 %v436, %v435
      %v443 = vpack.c.b16 %v438, %v437
      %v444 = vpack.c.b16 %v440, %v439
      %vm449 = vcmask 523264
      %v451 = vsel %vm449, %v415, 0
      %v454 = vsel %vm449, %v416, 0
      %456 = vmatpush.bf16.msra.mxu0 0
      %457 = vmatpush.bf16.msra.mxu0 0
      %458 = vmatpush.bf16.msra.mxu0 0
      %459 = vmatpush.bf16.msra.mxu0 0
      %460 = vmatpush.bf16.msra.mxu0 %v444
      %461 = vmatpush.bf16.msra.mxu0 %v443
      %462 = vmatpush.bf16.msra.mxu0 %v442
      %463 = vmatpush.bf16.msra.mxu0 %v441
      %464 = vmatmul.bf16.gmra.mxu0 %v451
      %v465 = vpop.f32.mrf.mxu0
      %v466 = vadd.f32 0.0, %v465
      %v467 = vpop.f32.mrf.mxu0
      %v468 = vadd.f32 0.0, %v467
      %469 = vmatmul.bf16.gmra.mxu0 %v454
      %v470 = vpop.f32.mrf.mxu0
      %v471 = vadd.f32 0.0, %v470
      %v472 = vpop.f32.mrf.mxu0
      %v473 = vadd.f32 0.0, %v472
      %474 = vdwg.mxu0
      %v475 = vadd.f32 %v402, %v466
      %v476 = vadd.f32 %v403, %v468
      %v477 = vadd.f32 %v404, %v471
      %v478 = vadd.f32 %v405, %v473
      %479 = vst [vmem:[#allocation2] sm:$0xff] %v475
      %480 = vst [vmem:[#allocation2 + $0x8] sm:$0xff] %v476
      %481 = vst [vmem:[#allocation2 + $0x10] sm:$0xff] %v477
      %482 = vst [vmem:[#allocation2 + $0x18] sm:$0xff] %v478
      // Predicated region
      $region57: #{nas_phy10000_forward.7} parent=51 // pred_check
        %p483 = pneg %p394
      $region58: #{nas_phy10000_forward.7} parent=51 // pred_check_branch
        %485 = sbr.rel (%p483) target = $region60
      $region59: #{nas_phy10000_forward.7} parent=51 // pred_region
        %v486 = vld [vmem:[#allocation2] sm:$0xff]
        %v487 = vld [vmem:[#allocation2 + $0x8] sm:$0xff]
        %v488 = vld [vmem:[#allocation2 + $0x10] sm:$0xff]
        %v489 = vld [vmem:[#allocation2 + $0x18] sm:$0xff]
        %v490 = vld [vmem:[%s379] sm:$0xff]
        %v491 = vld [vmem:[%s379 + $0x8] sm:$0xff]
        %v492 = vld [vmem:[%s379 + $0x10] sm:$0xff]
        %v493 = vld [vmem:[%s379 + $0x18] sm:$0xff]
        %495 = vset.pattern.permute.xlu0 0
        %496 = vperm.xlu0 %495, %v490
        %v497 = vpop.permute.xlu0 %496
        %500 = vset.pattern.permute.xlu0 0
        %501 = vperm.xlu0 %500, %v491
        %v502 = vpop.permute.xlu0 %501
        %505 = vset.pattern.permute.xlu0 0
        %506 = vperm.xlu0 %505, %v492
        %v507 = vpop.permute.xlu0 %506
        %510 = vset.pattern.permute.xlu0 0
        %511 = vperm.xlu0 %510, %v493
        %v512 = vpop.permute.xlu0 %511
        %v514 = vmul.f32 %v486, %v497
        %v515 = vmul.f32 %v487, %v502
        %v516 = vmul.f32 %v488, %v507
        %v517 = vmul.f32 %v489, %v512
        %v518 = vld [vmem:[%s385] sm:$0xf]
        %v519 = vld [vmem:[%s385 + $0x4] sm:$0xf]
        %v520 = vld [vmem:[%s385 + $0x8] sm:$0xf]
        %v521 = vld [vmem:[%s385 + $0xc] sm:$0xf]
        %v522 = vunpack.c.l.bf16 %v518
        %v523 = vunpack.c.l.bf16 %v519
        %v524 = vunpack.c.l.bf16 %v520
        %v525 = vunpack.c.l.bf16 %v521
        %v526 = vld [vmem:[%s4] sm:$0xff]
        %v527 = vld [vmem:[%s4 + $0x8] sm:$0xff]
        %v528 = vld [vmem:[%s4 + $0x10] sm:$0xff]
        %v529 = vld [vmem:[%s4 + $0x18] sm:$0xff]
        %v530 = vld [vmem:[%s4 + $0x20] sm:$0xff]
        %v531 = vld [vmem:[%s4 + $0x28] sm:$0xff]
        %v532 = vld [vmem:[%s4 + $0x30] sm:$0xff]
        %v533 = vld [vmem:[%s4 + $0x38] sm:$0xff]
        %v534 = vld [vmem:[%s4 + $0x40] sm:$0xff]
        %v535 = vld [vmem:[%s4 + $0x48] sm:$0xff]
        %v536 = vld [vmem:[%s4 + $0x50] sm:$0xff]
        %v537 = vld [vmem:[%s4 + $0x58] sm:$0xff]
        %v538 = vld [vmem:[%s4 + $0x60] sm:$0xff]
        %v539 = vld [vmem:[%s4 + $0x68] sm:$0xff]
        %v540 = vld [vmem:[%s4 + $0x70] sm:$0xff]
        %v541 = vld [vmem:[%s4 + $0x78] sm:$0xff]
        %v542 = vld [vmem:[%s5] sm:$0x1]
        %v544 = vperm.slane %v542, 0
        %546 = vmatpush.msra.mxu0 %v541
        %547 = vmatpush.msra.mxu0 %v540
        %548 = vmatpush.msra.mxu0 %v539
        %549 = vmatpush.msra.mxu0 %v538
        %550 = vmatpush.msra.mxu0 %v537
        %551 = vmatpush.msra.mxu0 %v536
        %552 = vmatpush.msra.mxu0 %v535
        %553 = vmatpush.msra.mxu0 %v534
        %554 = vmatpush.msra.mxu0 %v533
        %555 = vmatpush.msra.mxu0 %v532
        %556 = vmatpush.msra.mxu0 %v531
        %557 = vmatpush.msra.mxu0 %v530
        %558 = vmatpush.msra.mxu0 %v529
        %559 = vmatpush.msra.mxu0 %v528
        %560 = vmatpush.msra.mxu0 %v527
        %561 = vmatpush.msra.mxu0 %v526
        %562 = vmatmul.f32.gmra.mxu0 %v522
        %v563 = vpop.f32.mrf.mxu0
        %v564 = vadd.f32 %v544, %v563
        %565 = vmatmul.f32.gmra.mxu0 %v523
        %v566 = vpop.f32.mrf.mxu0
        %v567 = vadd.f32 %v544, %v566
        %568 = vmatmul.f32.gmra.mxu0 %v524
        %v569 = vpop.f32.mrf.mxu0
        %v570 = vadd.f32 %v544, %v569
        %571 = vmatmul.f32.gmra.mxu0 %v525
        %v572 = vpop.f32.mrf.mxu0
        %v573 = vadd.f32 %v544, %v572
        %574 = vdwg.mxu0
        %v575 = vadd.f32 %v514, %v564
        %v576 = vadd.f32 %v515, %v567
        %v577 = vadd.f32 %v516, %v570
        %v578 = vadd.f32 %v517, %v573
        %v579 = vmax.f32 %v575, 0.0
        %v580 = vmax.f32 %v576, 0.0
        %v581 = vmax.f32 %v577, 0.0
        %v582 = vmax.f32 %v578, 0.0
        %v583 = vadd.f32 %v522, %v579
        %v584 = vadd.f32 %v523, %v580
        %v585 = vadd.f32 %v524, %v581
        %v586 = vadd.f32 %v525, %v582
        %v587 = vtanh.pop %v583
        %v588 = vtanh.pop %v584
        %v589 = vtanh.pop %v585
        %v590 = vtanh.pop %v586
        %v591 = vld [vmem:[%s6] sm:$0xff]
        %v592 = vld [vmem:[%s6 + $0x8] sm:$0xff]
        %v593 = vld [vmem:[%s6 + $0x10] sm:$0xff]
        %v594 = vld [vmem:[%s6 + $0x18] sm:$0xff]
        %v595 = vld [vmem:[%s6 + $0x20] sm:$0xff]
        %v596 = vld [vmem:[%s6 + $0x28] sm:$0xff]
        %v597 = vld [vmem:[%s6 + $0x30] sm:$0xff]
        %v598 = vld [vmem:[%s6 + $0x38] sm:$0xff]
        %v599 = vld [vmem:[%s6 + $0x40] sm:$0xff]
        %v600 = vld [vmem:[%s6 + $0x48] sm:$0xff]
        %v601 = vld [vmem:[%s6 + $0x50] sm:$0xff]
        %v602 = vld [vmem:[%s6 + $0x58] sm:$0xff]
        %v603 = vld [vmem:[%s6 + $0x60] sm:$0xff]
        %v604 = vld [vmem:[%s6 + $0x68] sm:$0xff]
        %v605 = vld [vmem:[%s6 + $0x70] sm:$0xff]
        %v606 = vld [vmem:[%s6 + $0x78] sm:$0xff]
        %v607 = vld [vmem:[%s7] sm:$0x1]
        %v609 = vperm.slane %v607, 0
        %611 = vmatpush.msra.mxu0 %v606
        %612 = vmatpush.msra.mxu0 %v605
        %613 = vmatpush.msra.mxu0 %v604
        %614 = vmatpush.msra.mxu0 %v603
        %615 = vmatpush.msra.mxu0 %v602
        %616 = vmatpush.msra.mxu0 %v601
        %617 = vmatpush.msra.mxu0 %v600
        %618 = vmatpush.msra.mxu0 %v599
        %619 = vmatpush.msra.mxu0 %v598
        %620 = vmatpush.msra.mxu0 %v597
        %621 = vmatpush.msra.mxu0 %v596
        %622 = vmatpush.msra.mxu0 %v595
        %623 = vmatpush.msra.mxu0 %v594
        %624 = vmatpush.msra.mxu0 %v593
        %625 = vmatpush.msra.mxu0 %v592
        %626 = vmatpush.msra.mxu0 %v591
        %627 = vmatmul.f32.gmra.mxu0 %v587
        %v628 = vpop.f32.mrf.mxu0
        %v629 = vadd.f32 %v609, %v628
        %630 = vmatmul.f32.gmra.mxu0 %v588
        %v631 = vpop.f32.mrf.mxu0
        %v632 = vadd.f32 %v609, %v631
        %633 = vmatmul.f32.gmra.mxu0 %v589
        %v634 = vpop.f32.mrf.mxu0
        %v635 = vadd.f32 %v609, %v634
        %636 = vmatmul.f32.gmra.mxu0 %v590
        %v637 = vpop.f32.mrf.mxu0
        %v638 = vadd.f32 %v609, %v637
        %639 = vdwg.mxu0
        %640 = vmax.xlane.f32.xlu0 %v629
        %v641 = vpop.xlane.xlu0 %640
        %642 = vmax.xlane.f32.xlu0 %v632
        %v643 = vpop.xlane.xlu0 %642
        %644 = vmax.xlane.f32.xlu0 %v635
        %v645 = vpop.xlane.xlu0 %644
        %646 = vmax.xlane.f32.xlu0 %v638
        %v647 = vpop.xlane.xlu0 %646
        %v648 = vsub.f32 %v629, %v641
        %v649 = vsub.f32 %v632, %v643
        %v650 = vsub.f32 %v635, %v645
        %v651 = vsub.f32 %v638, %v647
        %v652 = vmul.f32 %v648, 1.442695
        %v653 = vpow.pop %v652
        %v654 = vmul.f32 %v649, 1.442695
        %v655 = vpow.pop %v654
        %v656 = vmul.f32 %v650, 1.442695
        %v657 = vpow.pop %v656
        %v658 = vmul.f32 %v651, 1.442695
        %v659 = vpow.pop %v658
        %660 = vadd.xlane.f32.xlu0 %v653
        %v661 = vpop.xlane.xlu0 %660
        %662 = vadd.xlane.f32.xlu0 %v655
        %v663 = vpop.xlane.xlu0 %662
        %664 = vadd.xlane.f32.xlu0 %v657
        %v665 = vpop.xlane.xlu0 %664
        %666 = vadd.xlane.f32.xlu0 %v659
        %v667 = vpop.xlane.xlu0 %666
        %v668 = vlog2.pop %v661
        %v669 = vmul.f32 %v668, 0.6931472
        %v670 = vlog2.pop %v663
        %v671 = vmul.f32 %v670, 0.6931472
        %v672 = vlog2.pop %v665
        %v673 = vmul.f32 %v672, 0.6931472
        %v674 = vlog2.pop %v667
        %v675 = vmul.f32 %v674, 0.6931472
        %v676 = vsub.f32 %v648, %v669
        %v677 = vsub.f32 %v649, %v671
        %v678 = vsub.f32 %v650, %v673
        %v679 = vsub.f32 %v651, %v675
        %680 = vst [vmem:[%s391] sm:$0xff] %v676
        %681 = vst [vmem:[%s391 + $0x8] sm:$0xff] %v677
        %682 = vst [vmem:[%s391 + $0x10] sm:$0xff] %v678
        %683 = vst [vmem:[%s391 + $0x18] sm:$0xff] %v679
      $region60: #{nas_phy10000_forward.7} parent=51 // pred_fallthru
        _
      %s684 = smul.u32 4, %s23
      %p685 = scmp.lt.s32.totalorder %s684, 7
      %s686 = scalar_select %p685, %s684, 7
      %s687 = smul.addr %s686, 8
      %s688 = scalar_lea.vmem %s8, %s687
      // Predicated region
      $region61: #{nas_phy10000_forward.7} parent=51 // pred_check
        %p689 = pneg %p239
      $region62: #{nas_phy10000_forward.7} parent=51 // pred_check_branch
        %691 = sbr.rel (%p689) target = $region64
      $region63: #{nas_phy10000_forward.7} parent=51 // pred_region
        %s692 = smul.u32 4, %s23
      $region64: #{nas_phy10000_forward.7} parent=51 // pred_fallthru
        _
    $region52: #{nas_phy10000_forward.7} parent=5 // pred_fallthru
      _
    %p693 = scmp.le.s32.totalorder 2, %s14
    // Predicated region
    $region65: #{nas_phy10000_forward.7} parent=5 // pred_check
      %p694 = pneg %p693
    $region66: #{nas_phy10000_forward.7} parent=5 // pred_check_branch
      %696 = sbr.rel (%p694) target = $region68
    $region67: #{nas_phy10000_forward.7} parent=5 // pred_region
      %s697 = ssub.s32 %s14, 2
      // Predicated region
      $region69: #{nas_phy10000_forward.7} parent=67 // pred_check
        %p698 = pneg %p245
      $region70: #{nas_phy10000_forward.7} parent=67 // pred_check_branch
        %700 = sbr.rel (%p698) target = $region72
      $region71: #{nas_phy10000_forward.7} parent=67 // pred_region
        %s701 = smul.u32 4, %s25
        %p702 = scmp.lt.s32.totalorder %s701, 7
        %s703 = scalar_select %p702, %s701, 7
        %s704 = smul.addr %s703, 8
        %s705 = scalar_lea.vmem %s8, %s704
      $region72: #{nas_phy10000_forward.7} parent=67 // pred_fallthru
        _
    $region68: #{nas_phy10000_forward.7} parent=5 // pred_fallthru
      _
  $region6: #{nas_phy10000_forward.7} parent=0 // loop_footer
    %s18 = sadd.s32 1, %s14
  $region7: #{nas_phy10000_forward.7} parent=0 // loop_footer_branch
    %13 = sbr.rel target = $region3
  $region8: #{nas_phy10000_forward.7} parent=0 // loop_exit
    _

</llo_original>
